<compile_context>
chip_gen: v6e
topology: v6e:2x2x1
jax: 0.10.0
libtpu: 0.0.40
codegen_flags: <defaults>
</compile_context>

<pallas_src>
import jax
import jax.numpy as jnp
from jax.experimental import pallas as pl
from jax.experimental.pallas import tpu as pltpu

_VMEM_LIMIT = 32 * 1024 * 1024


# --------------------------- tile pickers -----------------------------------
def _pick_row_tile(m, cap=1024):
    """Largest multiple-of-8 divisor of m that is <= cap; prefer >=2 grid steps."""
    best, t = None, 8
    while t <= min(m, cap):
        if m % t == 0:
            best = t
        t += 8
    if best is None:
        # TODO(synk): pad/mask the row tail when rows have no multiple-of-8 divisor.
        return m
    if m // best == 1 and best % 16 == 0:
        best //= 2          # >=2 grid steps -> both v7x TensorCores get work
    return best


def _pick_spatial_tile(s, c, cap_bytes=2 * 1024 * 1024):
    """Largest multiple-of-128 divisor of s with block bytes <= cap (lane-dense NCHW)."""
    best, t = None, 128
    while t <= s:
        if s % t == 0 and t * c * 4 <= cap_bytes:
            best = t
        t += 128
    if best is None:
        # TODO(synk): pad/mask when H*W is not a multiple of 128.
        return s
    if s // best == 1 and best % 256 == 0:
        best //= 2
    return best


# ------------- kernel 1: fused convs + bias + ReLU + BN partial stats -------
def _fused_conv_relu_stats_kernel(up_ref, x_ref, wu_ref, wx_ref, b_ref,
                                  out_ref, stats_ref):
    # up_ref: (tm, w*up_in)   x_ref: (tm, 2*2w*x_in)   out: (tm, 2*2w*C)
    y = (jnp.dot(up_ref[...], wu_ref[...], preferred_element_type=jnp.float32)
         + jnp.dot(x_ref[...], wx_ref[...], preferred_element_type=jnp.float32))
    y = jnp.maximum(y + b_ref[...], 0.0)                 # ReLU after concat == here
    out_ref[...] = y                                     # lane-dense store
    # BN partial statistics fused into the epilogue (per-column; folded back to
    # per-channel in the wrapper).  Rows 2..7 of the (8, n_cols) block are padding.
    s = jnp.sum(y, axis=0, keepdims=True)
    sq = jnp.sum(y * y, axis=0, keepdims=True)
    stats_ref[...] = jnp.concatenate(
        [s, sq, jnp.zeros((6, y.shape[1]), jnp.float32)], axis=0)


# ------------- kernel 2: BN affine fused with NHWC -> NCHW ------------------
def _bn_nchw_kernel(x_ref, scale_ref, shift_ref, o_ref):
    # x_ref: (1, ts, C) NHWC tile; o_ref: (1, C, ts) NCHW tile (ts multiple of 128).
    _, ts, c = x_ref.shape
    v = x_ref[...].reshape(ts, c) * scale_ref[...] + shift_ref[...]
    o_ref[...] = v.T.reshape(1, c, ts)                   # lane-dense NCHW store


# ------------------------- fused weight construction ------------------------
def _build_fused_weights(w_tr, b_tr, w_x, b_x, w, dtype):
    """Weights for the folded layout: rows=(j,ci) / (a,x,ci), cols=(a, x=2j+b, c)."""
    up_in, up_out = w_tr.shape[0], w_tr.shape[1]
    x_out, x_in = w_x.shape[0], w_x.shape[1]
    c_tot = up_out + x_out
    f32 = jnp.float32
    # ConvTranspose2d(2, stride=2): out[n,c,2i+a,2j+b] = sum_ci up[n,ci,i,j]*w_tr[ci,c,a,b]
    core_u = jnp.zeros((up_in, c_tot, 2, 2), f32).at[:, :up_out, :, :].set(
        w_tr.astype(f32))
    eye_j = jnp.eye(w, dtype=f32)
    wu = jnp.einsum("jJ,icab->jiaJbc", eye_j, core_u)
    wu = wu.reshape(w * up_in, 2 * 2 * w * c_tot)
    # 1x1 Conv2d: out[n,c,y,x] = sum_ci x[n,ci,y,x]*w_x[c-up_out,ci]
    core_x = jnp.zeros((x_in, c_tot), f32).at[:, up_out:].set(
        w_x.reshape(x_out, x_in).astype(f32).T)
    eye_p = jnp.eye(2 * 2 * w, dtype=f32)
    wx = jnp.einsum("pq,ic->piqc", eye_p, core_x)
    wx = wx.reshape(2 * 2 * w * x_in, 2 * 2 * w * c_tot)
    bias = jnp.tile(jnp.concatenate([b_tr, b_x]).astype(f32), 2 * 2 * w)[None, :]
    return wu.astype(dtype), wx.astype(dtype), bias


# ----------------------------- forward ---------------------------------------
def unet_block_forward(up_p, x_p, params, eps=1e-5, mxu_dtype=jnp.float32):
    """up_p: (N, up_in, H, W)  x_p: (N, x_in, 2H, 2W)  -> (N, n_out, 2H, 2W).

    Set mxu_dtype=jnp.bfloat16 on v6e/v7x for real channel counts (halves HBM/VMEM
    traffic, fills the 256-wide MXU); kept f32 here for the exactness check.
    """
    n, up_in, h, w = up_p.shape
    _, x_in, h2, w2 = x_p.shape
    w_tr, b_tr = params["w_tr"], params["b_tr"]
    w_x, b_x = params["w_x"], params["b_x"]
    gamma, beta = params["gamma"], params["beta"]
    up_out, x_out = w_tr.shape[1], w_x.shape[0]
    c_tot = up_out + x_out
    n_cols = 2 * 2 * w * c_tot                     # (a, x, c) folded into lanes
    rows = n * h

    wu, wx, bias = _build_fused_weights(w_tr, b_tr, w_x, b_x, w, mxu_dtype)

    # NCHW -> channels-last (glue on the small inputs; the big activation tensor
    # never round-trips through XLA transposes/concats).
    up_flat = jnp.transpose(up_p, (0, 2, 3, 1)).reshape(rows, w * up_in)
    x_flat = jnp.transpose(x_p, (0, 2, 3, 1)).reshape(rows, 2 * 2 * w * x_in)
    up_flat = up_flat.astype(mxu_dtype)
    x_flat = x_flat.astype(mxu_dtype)

    tm = _pick_row_tile(rows)
    n_tiles = rows // tm

    cat, stats = pl.pallas_call(
        _fused_conv_relu_stats_kernel,
        out_shape=(jax.ShapeDtypeStruct((rows, n_cols), jnp.float32),
                   jax.ShapeDtypeStruct((n_tiles * 8, n_cols), jnp.float32)),
        grid_spec=pltpu.PrefetchScalarGridSpec(
            num_scalar_prefetch=0,
            grid=(n_tiles,),
            in_specs=[
                pl.BlockSpec((tm, w * up_in), lambda i: (i, 0)),
                pl.BlockSpec((tm, 2 * 2 * w * x_in), lambda i: (i, 0)),
                pl.BlockSpec((w * up_in, n_cols), lambda i: (0, 0)),
                pl.BlockSpec((2 * 2 * w * x_in, n_cols), lambda i: (0, 0)),
                pl.BlockSpec((1, n_cols), lambda i: (0, 0)),
            ],
            out_specs=(pl.BlockSpec((tm, n_cols), lambda i: (i, 0)),
                       pl.BlockSpec((8, n_cols), lambda i: (i, 0))),
        ),
        compiler_params=pltpu.CompilerParams(
            dimension_semantics=("parallel",),
            vmem_limit_bytes=_VMEM_LIMIT),
    )(up_flat, x_flat, wu, wx, bias)

    # Combine per-tile partial stats (tiny) and fold lane groups back to channels.
    stats = stats.reshape(n_tiles, 8, n_cols)
    col_sum = stats[:, 0, :].sum(axis=0)
    col_sq = stats[:, 1, :].sum(axis=0)
    ch_sum = col_sum.reshape(2 * 2 * w, c_tot).sum(axis=0)
    ch_sq = col_sq.reshape(2 * 2 * w, c_tot).sum(axis=0)
    count = rows * 2 * 2 * w                       # = N * 2H * 2W
    mean = ch_sum / count
    var = jnp.maximum(ch_sq / count - mean * mean, 0.0)   # clamp: cancellation guard
    scale = gamma * jax.lax.rsqrt(var + eps)
    shift = beta - mean * scale
    # TODO(synk): PyTorch BatchNorm2d (training) also updates running_mean/var with
    # the unbiased variance; not emitted here (forward output is unaffected).

    # BN affine + NHWC -> NCHW fused.
    s_total = h2 * w2
    ts = _pick_spatial_tile(s_total, c_tot)
    cat_nhwc = cat.reshape(n, s_total, c_tot)      # bit-identical view, no HBM pass
    out = pl.pallas_call(
        _bn_nchw_kernel,
        out_shape=jax.ShapeDtypeStruct((n, c_tot, s_total), jnp.float32),
        grid_spec=pltpu.PrefetchScalarGridSpec(
            num_scalar_prefetch=0,
            grid=(n, s_total // ts),
            in_specs=[
                pl.BlockSpec((1, ts, c_tot), lambda ni, si: (ni, si, 0)),
                pl.BlockSpec((1, c_tot), lambda ni, si: (0, 0)),
                pl.BlockSpec((1, c_tot), lambda ni, si: (0, 0)),
            ],
            out_specs=pl.BlockSpec((1, c_tot, ts), lambda ni, si: (ni, 0, si)),
        ),
        compiler_params=pltpu.CompilerParams(
            dimension_semantics=("parallel", "parallel"),
            vmem_limit_bytes=_VMEM_LIMIT),
    )(cat_nhwc,
      scale.reshape(1, c_tot).astype(jnp.float32),
      shift.reshape(1, c_tot).astype(jnp.float32))

    return out.reshape(n, c_tot, h2, w2)           # already NCHW


# ---------------- pure-JAX reference (correctness check only) ----------------
def reference_forward(up_p, x_p, params, eps=1e-5):
    w_tr, b_tr = params["w_tr"], params["b_tr"]
    w_x, b_x = params["w_x"], params["b_x"]
    gamma, beta = params["gamma"], params["beta"]
    t = jnp.einsum("ncij,cdab->ndiajb", up_p, w_tr)
    n_, d_, i_, a_, j_, b_ = t.shape
    t = t.reshape(n_, d_, i_ * a_, j_ * b_) + b_tr[None, :, None, None]
    xx = jnp.einsum("ncij,dc->ndij", x_p,
                    w_x.reshape(w_x.shape[0], w_x.shape[1])) + b_x[None, :, None, None]
    r = jnp.maximum(jnp.concatenate([t, xx], axis=1), 0.0)
    mean = r.mean(axis=(0, 2, 3), keepdims=True)
    var = ((r - mean) ** 2).mean(axis=(0, 2, 3), keepdims=True)
    return ((r - mean) * jax.lax.rsqrt(var + eps)
            * gamma[None, :, None, None] + beta[None, :, None, None])


if __name__ == "__main__":
    key = jax.random.PRNGKey(0)
    ks = jax.random.split(key, 8)

    # UnetBlock(up_in=8, x_in=8, n_out=16) -> up_out = x_out = 8
    N, up_in, x_in, n_out = 2, 8, 8, 16
    up_out = x_out = n_out // 2
    H, W = 8, 8                                   # up_p spatial; x_p is (2H, 2W)

    params = {
        "w_tr": 0.1 * jax.random.normal(ks[0], (up_in, up_out, 2, 2), jnp.float32),
        "b_tr": 0.1 * jax.random.normal(ks[1], (up_out,), jnp.float32),
        "w_x": 0.1 * jax.random.normal(ks[2], (x_out, x_in, 1, 1), jnp.float32),
        "b_x": 0.1 * jax.random.normal(ks[3], (x_out,), jnp.float32),
        "gamma": 1.0 + 0.1 * jax.random.normal(ks[4], (n_out,), jnp.float32),
        "beta": 0.1 * jax.random.normal(ks[5], (n_out,), jnp.float32),
    }

    up_p = jax.random.normal(ks[6], (N, up_in, H, W), jnp.float32)
    x_p = jax.random.normal(ks[7], (N, x_in, 2 * H, 2 * W), jnp.float32)

    fwd = jax.jit(unet_block_forward)
    out = jax.block_until_ready(fwd(up_p, x_p, params))

    ref = reference_forward(up_p, x_p, params)
    assert out.shape == (N, n_out, 2 * H, 2 * W), out.shape
    assert jnp.allclose(out, ref, atol=1e-4, rtol=1e-4), \
        float(jnp.max(jnp.abs(out - ref)))

    print("KERNEL_OK")
</pallas_src>

<mosaic_0001>
module attributes {stable_mosaic.version = 11 : i64} {
  func.func @_fused_conv_relu_stats_kernel(%arg0: i32, %arg1: memref<8x64xf32, #tpu.memory_space<vmem>>, %arg2: memref<8x256xf32, #tpu.memory_space<vmem>>, %arg3: memref<64x512xf32, #tpu.memory_space<vmem>>, %arg4: memref<256x512xf32, #tpu.memory_space<vmem>>, %arg5: memref<1x512xf32, #tpu.memory_space<vmem>>, %arg6: memref<8x512xf32, #tpu.memory_space<vmem>>, %arg7: memref<8x512xf32, #tpu.memory_space<vmem>>) attributes {dimension_semantics = [#tpu.dimension_semantics<parallel>], iteration_bounds = array<i64: 2>, scalar_prefetch = 0 : i64, scratch_operands = 0 : i64, tpu.core_type = #tpu.core_type<tc>, window_params = [{transform_indices = @transform_0, window_bounds = array<i64: 8, 64>}, {transform_indices = @transform_1, window_bounds = array<i64: 8, 256>}, {pipeline_mode = #tpu.pipeline_mode<synchronous>, transform_indices = @transform_2, window_bounds = array<i64: 64, 512>}, {pipeline_mode = #tpu.pipeline_mode<synchronous>, transform_indices = @transform_3, window_bounds = array<i64: 256, 512>}, {pipeline_mode = #tpu.pipeline_mode<synchronous>, transform_indices = @transform_4, window_bounds = array<i64: 1, 512>}, {transform_indices = @transform_5, window_bounds = array<i64: 8, 512>}, {transform_indices = @transform_6, window_bounds = array<i64: 8, 512>}]} {
    %c0 = arith.constant 0 : index
    %c0_0 = arith.constant 0 : index
    %0 = vector.load %arg1[%c0, %c0_0] : memref<8x64xf32, #tpu.memory_space<vmem>>, vector<8x64xf32>
    %c0_1 = arith.constant 0 : index
    %c0_2 = arith.constant 0 : index
    %1 = vector.load %arg3[%c0_1, %c0_2] : memref<64x512xf32, #tpu.memory_space<vmem>>, vector<64x512xf32>
    %cst = arith.constant dense<0.000000e+00> : vector<8x512xf32>
    %2 = tpu.matmul %0, %1, %cst {dimension_numbers = #tpu.dot_dimension_numbers<[1], [0], [0], [1], [0, 0, 1, 1], [], []>} : vector<8x64xf32>, vector<64x512xf32>, vector<8x512xf32> -> vector<8x512xf32>
    %c0_3 = arith.constant 0 : index
    %c0_4 = arith.constant 0 : index
    %3 = vector.load %arg2[%c0_3, %c0_4] : memref<8x256xf32, #tpu.memory_space<vmem>>, vector<8x256xf32>
    %c0_5 = arith.constant 0 : index
    %c0_6 = arith.constant 0 : index
    %4 = vector.load %arg4[%c0_5, %c0_6] : memref<256x512xf32, #tpu.memory_space<vmem>>, vector<256x512xf32>
    %cst_7 = arith.constant dense<0.000000e+00> : vector<8x512xf32>
    %5 = tpu.matmul %3, %4, %cst_7 {dimension_numbers = #tpu.dot_dimension_numbers<[1], [0], [0], [1], [0, 0, 1, 1], [], []>} : vector<8x256xf32>, vector<256x512xf32>, vector<8x512xf32> -> vector<8x512xf32>
    %6 = arith.addf %2, %5 : vector<8x512xf32>
    %c0_8 = arith.constant 0 : index
    %c0_9 = arith.constant 0 : index
    %7 = vector.load %arg5[%c0_8, %c0_9] : memref<1x512xf32, #tpu.memory_space<vmem>>, vector<1x512xf32>
    %8 = vector.broadcast %7 : vector<1x512xf32> to vector<8x512xf32>
    %9 = arith.addf %6, %8 : vector<8x512xf32>
    %cst_10 = arith.constant 0.000000e+00 : f32
    %10 = vector.broadcast %cst_10 : f32 to vector<8x512xf32>
    %11 = arith.maximumf %9, %10 : vector<8x512xf32>
    %c0_11 = arith.constant 0 : index
    %c0_12 = arith.constant 0 : index
    %12 = vector.load %arg6[%c0_11, %c0_12] : memref<8x512xf32, #tpu.memory_space<vmem>>, vector<8x512xf32>
    tpu.vector_store %arg6[%c0_11, %c0_12], %11 {strides = array<i32>} : memref<8x512xf32, #tpu.memory_space<vmem>>, vector<8x512xf32>,
    %cst_13 = arith.constant dense<0.000000e+00> : vector<512xf32>
    %13 = vector.multi_reduction <add>, %11, %cst_13 [0] : vector<8x512xf32> to vector<512xf32>
    %14 = vector.shape_cast %13 : vector<512xf32> to vector<1x512xf32>
    %15 = arith.mulf %11, %11 : vector<8x512xf32>
    %cst_14 = arith.constant dense<0.000000e+00> : vector<512xf32>
    %16 = vector.multi_reduction <add>, %15, %cst_14 [0] : vector<8x512xf32> to vector<512xf32>
    %17 = vector.shape_cast %16 : vector<512xf32> to vector<1x512xf32>
    %cst_15 = arith.constant 0.000000e+00 : f32
    %18 = vector.broadcast %cst_15 : f32 to vector<6x512xf32>
    %19 = tpu.concatenate %14, %17, %18 in 0 : vector<1x512xf32>, vector<1x512xf32>, vector<6x512xf32> -> vector<8x512xf32>
    %c0_16 = arith.constant 0 : index
    %c0_17 = arith.constant 0 : index
    %20 = vector.load %arg7[%c0_16, %c0_17] : memref<8x512xf32, #tpu.memory_space<vmem>>, vector<8x512xf32>
    tpu.vector_store %arg7[%c0_16, %c0_17], %19 {strides = array<i32>} : memref<8x512xf32, #tpu.memory_space<vmem>>, vector<8x512xf32>,
    return
  }
  func.func @transform_0(%arg0: i32) -> (i32, i32) {
    %c0_i32 = arith.constant 0 : i32
    %c0_i32_0 = arith.constant 0 : i32
    return %arg0, %c0_i32 : i32, i32
  }
  func.func @transform_1(%arg0: i32) -> (i32, i32) {
    %c0_i32 = arith.constant 0 : i32
    %c0_i32_0 = arith.constant 0 : i32
    return %arg0, %c0_i32 : i32, i32
  }
  func.func @transform_2(%arg0: i32) -> (i32, i32) {
    %c0_i32 = arith.constant 0 : i32
    %c0_i32_0 = arith.constant 0 : i32
    %c0_i32_1 = arith.constant 0 : i32
    return %c0_i32, %c0_i32_0 : i32, i32
  }
  func.func @transform_3(%arg0: i32) -> (i32, i32) {
    %c0_i32 = arith.constant 0 : i32
    %c0_i32_0 = arith.constant 0 : i32
    %c0_i32_1 = arith.constant 0 : i32
    return %c0_i32, %c0_i32_0 : i32, i32
  }
  func.func @transform_4(%arg0: i32) -> (i32, i32) {
    %c0_i32 = arith.constant 0 : i32
    %c0_i32_0 = arith.constant 0 : i32
    %c0_i32_1 = arith.constant 0 : i32
    return %c0_i32, %c0_i32_0 : i32, i32
  }
  func.func @transform_5(%arg0: i32) -> (i32, i32) {
    %c0_i32 = arith.constant 0 : i32
    %c0_i32_0 = arith.constant 0 : i32
    return %arg0, %c0_i32 : i32, i32
  }
  func.func @transform_6(%arg0: i32) -> (i32, i32) {
    %c0_i32 = arith.constant 0 : i32
    %c0_i32_0 = arith.constant 0 : i32
    return %arg0, %c0_i32 : i32, i32
  }
}

module attributes {stable_mosaic.version = 11 : i64} {
  func.func @_bn_nchw_kernel(%arg0: i32, %arg1: i32, %arg2: memref<1x128x16xf32, #tpu.memory_space<vmem>>, %arg3: memref<1x16xf32, #tpu.memory_space<vmem>>, %arg4: memref<1x16xf32, #tpu.memory_space<vmem>>, %arg5: memref<1x16x128xf32, #tpu.memory_space<vmem>>) attributes {dimension_semantics = [#tpu.dimension_semantics<parallel>, #tpu.dimension_semantics<parallel>], iteration_bounds = array<i64: 2, 2>, scalar_prefetch = 0 : i64, scratch_operands = 0 : i64, tpu.core_type = #tpu.core_type<tc>, window_params = [{transform_indices = @transform_0, window_bounds = array<i64: 1, 128, 16>}, {pipeline_mode = #tpu.pipeline_mode<synchronous>, transform_indices = @transform_1, window_bounds = array<i64: 1, 16>}, {pipeline_mode = #tpu.pipeline_mode<synchronous>, transform_indices = @transform_2, window_bounds = array<i64: 1, 16>}, {transform_indices = @transform_3, window_bounds = array<i64: 1, 16, 128>}]} {
    %c0 = arith.constant 0 : index
    %c0_0 = arith.constant 0 : index
    %c0_1 = arith.constant 0 : index
    %0 = vector.load %arg2[%c0, %c0_0, %c0_1] : memref<1x128x16xf32, #tpu.memory_space<vmem>>, vector<1x128x16xf32>
    %1 = vector.shape_cast %0 : vector<1x128x16xf32> to vector<128x16xf32>
    %c0_2 = arith.constant 0 : index
    %c0_3 = arith.constant 0 : index
    %2 = vector.load %arg3[%c0_2, %c0_3] : memref<1x16xf32, #tpu.memory_space<vmem>>, vector<1x16xf32>
    %3 = vector.broadcast %2 : vector<1x16xf32> to vector<128x16xf32>
    %4 = arith.mulf %1, %3 : vector<128x16xf32>
    %c0_4 = arith.constant 0 : index
    %c0_5 = arith.constant 0 : index
    %5 = vector.load %arg4[%c0_4, %c0_5] : memref<1x16xf32, #tpu.memory_space<vmem>>, vector<1x16xf32>
    %6 = vector.broadcast %5 : vector<1x16xf32> to vector<128x16xf32>
    %7 = arith.addf %4, %6 : vector<128x16xf32>
    %8 = tpu.transpose %7, [1, 0] : vector<128x16xf32> -> vector<16x128xf32>
    %9 = vector.shape_cast %8 : vector<16x128xf32> to vector<1x16x128xf32>
    %c0_6 = arith.constant 0 : index
    %c0_7 = arith.constant 0 : index
    %c0_8 = arith.constant 0 : index
    %10 = vector.load %arg5[%c0_6, %c0_7, %c0_8] : memref<1x16x128xf32, #tpu.memory_space<vmem>>, vector<1x16x128xf32>
    tpu.vector_store %arg5[%c0_6, %c0_7, %c0_8], %9 {strides = array<i32>} : memref<1x16x128xf32, #tpu.memory_space<vmem>>, vector<1x16x128xf32>,
    return
  }
  func.func @transform_0(%arg0: i32, %arg1: i32) -> (i32, i32, i32) {
    %c0_i32 = arith.constant 0 : i32
    %c0_i32_0 = arith.constant 0 : i32
    return %arg0, %arg1, %c0_i32 : i32, i32, i32
  }
  func.func @transform_1(%arg0: i32, %arg1: i32) -> (i32, i32) {
    %c0_i32 = arith.constant 0 : i32
    %c0_i32_0 = arith.constant 0 : i32
    %c0_i32_1 = arith.constant 0 : i32
    return %c0_i32, %c0_i32_0 : i32, i32
  }
  func.func @transform_2(%arg0: i32, %arg1: i32) -> (i32, i32) {
    %c0_i32 = arith.constant 0 : i32
    %c0_i32_0 = arith.constant 0 : i32
    %c0_i32_1 = arith.constant 0 : i32
    return %c0_i32, %c0_i32_0 : i32, i32
  }
  func.func @transform_3(%arg0: i32, %arg1: i32) -> (i32, i32, i32) {
    %c0_i32 = arith.constant 0 : i32
    %c0_i32_0 = arith.constant 0 : i32
    return %arg0, %c0_i32, %arg1 : i32, i32, i32
  }
}

</mosaic_0001>

<llo_original>
// kernel: tile.8
$region0: #{tile.8}
  #allocation0 [shape = 's32[1]{0}', space=sflag, size = 0x4, scoped, tag = 'scoped memory for tile.8']
  %s0 = inlined_call_operand.vmem [shape: f32[16], index: 0, kind: input, shape index: {}]
  %s1 = inlined_call_operand.vmem [shape: f32[32,16], index: 1, kind: output, shape index: {}]
  // Predicated region
  $region2: #{tile.8} parent=0 // pred_check
    _
  $region3: #{tile.8} parent=0 // pred_check_branch
    %3 = sbr.rel (0) target = $region5
  $region4: #{tile.8} parent=0 // pred_region
    _
  $region5: #{tile.8} parent=0 // pred_fallthru
    _
  %v4 = vld [vmem:[%s0] ss:$0 sm:$0xff]
  %5 = vst [vmem:[%s1] sm:$0xff] %v4
  %s6 = scalar_lea.vmem %s1, 8
  %7 = vst [vmem:[%s6] sm:$0xff] %v4
  %s8 = scalar_lea.vmem %s1, 16
  %9 = vst [vmem:[%s8] sm:$0xff] %v4
  %s10 = scalar_lea.vmem %s1, 24
  %11 = vst [vmem:[%s10] sm:$0xff] %v4

// kernel: tile.9
$region0: #{tile.9}
  %s0 = inlined_call_operand.vmem [shape: f32[32,16], index: 0, kind: input, shape index: {}]
  %s1 = inlined_call_operand.vmem [shape: f32[1,512], index: 1, kind: output, shape index: {}]
  $region1: #{tile.9} parent=0
    #allocation0 [shape = 'u8[16384]{0}', space=vmem, size = 0x4000, scoped, tag = 'scoped mem for output reshape']
    %v2 = vld [vmem:[%s0] ss:$8 sm:$0xf]
    %vm3 = vcmask 130048
    %4 = vst.msk [vmem:[#allocation0] ss:$8 sm:$0xf] %vm3, %v2
    %s5 = scalar_lea.vmem %s0, 7
    %v6 = vld [vmem:[%s5] ss:$8 sm:$0xf]
    %7 = vrot.lane.b32.xlu0 %v6, 112
    %v8 = vpop.permute.xlu0 %7
    %vm9 = vcmask 1048448
    %10 = vst.msk [vmem:[#allocation0] ss:$8 sm:$0xf] %vm9, %v8
    %s11 = scalar_lea.vmem %s0, 6
    %v12 = vld [vmem:[%s11] ss:$8 sm:$0xf]
    %13 = vrot.lane.b32.xlu0 %v12, 96
    %v14 = vpop.permute.xlu0 %13
    %vm15 = vcmask 917248
    %16 = vst.msk [vmem:[#allocation0] ss:$8 sm:$0xf] %vm15, %v14
    %s17 = scalar_lea.vmem %s0, 5
    %v18 = vld [vmem:[%s17] ss:$8 sm:$0xf]
    %19 = vrot.lane.b32.xlu0 %v18, 80
    %v20 = vpop.permute.xlu0 %19
    %vm21 = vcmask 786048
    %22 = vst.msk [vmem:[#allocation0] ss:$8 sm:$0xf] %vm21, %v20
    %s23 = scalar_lea.vmem %s0, 4
    %v24 = vld [vmem:[%s23] ss:$8 sm:$0xf]
    %25 = vrot.lane.b32.xlu0 %v24, 64
    %v26 = vpop.permute.xlu0 %25
    %vm27 = vcmask 654848
    %28 = vst.msk [vmem:[#allocation0] ss:$8 sm:$0xf] %vm27, %v26
    %s29 = scalar_lea.vmem %s0, 3
    %v30 = vld [vmem:[%s29] ss:$8 sm:$0xf]
    %31 = vrot.lane.b32.xlu0 %v30, 48
    %v32 = vpop.permute.xlu0 %31
    %vm33 = vcmask 523648
    %34 = vst.msk [vmem:[#allocation0] ss:$8 sm:$0xf] %vm33, %v32
    %s35 = scalar_lea.vmem %s0, 2
    %v36 = vld [vmem:[%s35] ss:$8 sm:$0xf]
    %37 = vrot.lane.b32.xlu0 %v36, 32
    %v38 = vpop.permute.xlu0 %37
    %vm39 = vcmask 392448
    %40 = vst.msk [vmem:[#allocation0] ss:$8 sm:$0xf] %vm39, %v38
    %s41 = scalar_lea.vmem %s0, 1
    %v42 = vld [vmem:[%s41] ss:$8 sm:$0xf]
    %43 = vrot.lane.b32.xlu0 %v42, 16
    %v44 = vpop.permute.xlu0 %43
    %vm45 = vcmask 261248
    %46 = vst.msk [vmem:[#allocation0] ss:$8 sm:$0xf] %vm45, %v44
    %s48 = sshll.u32 1, 1
    %s49 = ssub.s32 %s48, 1
    %v51 = vld [vmem:[#allocation0] sm:%s49]
    %s52 = sshll.u32 1, 1
    %s53 = ssub.s32 %s52, 1
    %54 = vst [vmem:[%s1] sm:%s53] %v51
    %s55 = scalar_lea.vmem [#allocation0], 8
    %v56 = vld [vmem:[%s55] sm:%s49]
    %s57 = sshll.u32 1, 1
    %s58 = ssub.s32 %s57, 1
    %s59 = scalar_lea.vmem %s1, 1
    %60 = vst [vmem:[%s59] sm:%s58] %v56
    %s61 = scalar_lea.vmem [#allocation0], 16
    %v62 = vld [vmem:[%s61] sm:%s49]
    %s63 = sshll.u32 1, 1
    %s64 = ssub.s32 %s63, 1
    %s65 = smul.addr 1, 2
    %s66 = scalar_lea.vmem %s1, %s65
    %67 = vst [vmem:[%s66] sm:%s64] %v62
    %s68 = scalar_lea.vmem [#allocation0], 24
    %v69 = vld [vmem:[%s68] sm:%s49]
    %s70 = sshll.u32 1, 1
    %s71 = ssub.s32 %s70, 1
    %s72 = smul.addr 1, 3
    %s73 = scalar_lea.vmem %s1, %s72
    %74 = vst [vmem:[%s73] sm:%s71] %v69

// kernel: unet_block_forward.3
$region0: #{unet_block_forward.3}
  #allocation0 [shape = 'u32[]', space=smem, size = 0x4, offset = 0x4, fixed_abs, tag = 'smem constant byte address 0x4 - core index']
  #allocation1 [shape = 'u32[144,128]{1,0:T(1,128)}', space=vmem, size = 0x12000, scoped, tag = 'internal scratch']
  %s0 = inlined_call_operand.vmem [shape: f32[2,256,16], index: 0, kind: input, shape index: {}]
  %s1 = inlined_call_operand.vmem [shape: f32[1,16], index: 1, kind: input, shape index: {}]
  %s2 = inlined_call_operand.vmem [shape: f32[1,16], index: 2, kind: input, shape index: {}]
  %s3 = inlined_call_operand.vmem [shape: f32[2,16,256], index: 3, kind: output, shape index: {}]
  %s4 = sld [smem:[#allocation0]]
  $region79: #{unet_block_forward.3} parent=0
    _
  %s6 = ssub.s32 1, %s4
  %s7 = scalar_select 0, %s6, %s4
  $region1: #{unet_block_forward.3} parent=0
    #allocation2 [shape = 'u8[16384]{0}', space=vmem, size = 0x4000, scoped, tag = 'output window, operand 0']
    loop: start=0, step=1, limit=6
    $region2: #{unet_block_forward.3} parent=1 // loop_pre_header
      _
    $region3: #{unet_block_forward.3} parent=1 // loop_header
      %s9 = sphi 0, %s13
      %p10 = scmp.ge.s32.totalorder %s9, 6
      %s16 = sphi 0, %s28
      %s17 = sphi 0, %s24
      %s18 = sphi 0, %s16
      %s19 = sphi 0, %s17
      %s20 = sphi 0, %s18
      %s21 = sphi 0, %s19
      %s33 = sphi 0, %s35
      %s36 = sphi 0, %s33
      %s37 = sphi 0, %s36
      %s53 = sphi 0, %s37
      %s57 = sphi 0, %s57
      %s59 = sphi 0, %s57
      %s60 = sphi 0, %s59
      %s74 = sphi 0, %s60
      %s78 = sphi 0, %s78
      %s80 = sphi 0, %s78
      %s81 = sphi 0, %s80
      %s95 = sphi 0, %s81
      %s103 = sphi 0, %s105
      %s106 = sphi 0, %s103
      %s107 = sphi 0, %s106
      %s123 = sphi 0, %s107
    $region4: #{unet_block_forward.3} parent=1 // loop_header_branch
      %12 = sbr.rel (%p10) target = $region8
    $region5: #{unet_block_forward.3} parent=1 // loop_body
      %s14 = ssub.s32 %s9, 1
      %s15 = ssub.s32 %s9, 2
      %s22 = sadd.s32 1, %s17
      %p23 = scmp.ge.s32.totalorder %s22, 2
      %s24 = scalar_select %p23, 0, %s22
      %s25 = sadd.s32 1, %s16
      %s26 = scalar_select %p23, %s25, %s16
      %p27 = scmp.ge.s32.totalorder %s26, 2
      %s28 = scalar_select %p27, 0, %s26
      %s29 = ssub.s32 %s16, %s28
      %s30 = ssub.s32 %s17, %s24
      %s31 = sor.u32 %s29, %s30
      %p32 = scmp.eq.s32.totalorder %s31, 0
      %s34 = sadd.s32 %s33, 1
      %s35 = scalar_select %p32, %s33, %s34
      %p38 = pneg %p32
      %p39 = scmp.eq.s32.totalorder %s9, 3
      %p40 = por %p38, %p39
      %p41 = scmp.ne.s32.totalorder %s33, %s36
      %p42 = scmp.eq.s32.totalorder %s9, 0
      %p43 = por %p41, %p42
      %p44 = scmp.ne.s32.totalorder %s33, %s36
      %p45 = scmp.eq.s32.totalorder %s14, 3
      %p46 = por %p44, %p45
      %p47 = scmp.ne.s32.totalorder %s36, %s37
      %p48 = scmp.eq.s32.totalorder %s14, 0
      %p49 = por %p47, %p48
      %p50 = scmp.ne.s32.totalorder %s36, %s37
      %p51 = scmp.eq.s32.totalorder %s15, 3
      %p52 = por %p50, %p51
      %p54 = scmp.ne.s32.totalorder %s37, %s53
      %p55 = scmp.eq.s32.totalorder %s15, 0
      %p56 = por %p54, %p55
      %s58 = sadd.s32 %s57, 1
      %p61 = scmp.eq.s32.totalorder %s9, 3
      %p62 = scmp.ne.s32.totalorder %s57, %s59
      %p63 = scmp.eq.s32.totalorder %s9, 0
      %p64 = por %p62, %p63
      %p65 = scmp.ne.s32.totalorder %s57, %s59
      %p66 = scmp.eq.s32.totalorder %s14, 3
      %p67 = por %p65, %p66
      %p68 = scmp.ne.s32.totalorder %s59, %s60
      %p69 = scmp.eq.s32.totalorder %s14, 0
      %p70 = por %p68, %p69
      %p71 = scmp.ne.s32.totalorder %s59, %s60
      %p72 = scmp.eq.s32.totalorder %s15, 3
      %p73 = por %p71, %p72
      %p75 = scmp.ne.s32.totalorder %s60, %s74
      %p76 = scmp.eq.s32.totalorder %s15, 0
      %p77 = por %p75, %p76
      %s79 = sadd.s32 %s78, 1
      %p82 = scmp.eq.s32.totalorder %s9, 3
      %p83 = scmp.ne.s32.totalorder %s78, %s80
      %p84 = scmp.eq.s32.totalorder %s9, 0
      %p85 = por %p83, %p84
      %p86 = scmp.ne.s32.totalorder %s78, %s80
      %p87 = scmp.eq.s32.totalorder %s14, 3
      %p88 = por %p86, %p87
      %p89 = scmp.ne.s32.totalorder %s80, %s81
      %p90 = scmp.eq.s32.totalorder %s14, 0
      %p91 = por %p89, %p90
      %p92 = scmp.ne.s32.totalorder %s80, %s81
      %p93 = scmp.eq.s32.totalorder %s15, 3
      %p94 = por %p92, %p93
      %p96 = scmp.ne.s32.totalorder %s81, %s95
      %p97 = scmp.eq.s32.totalorder %s15, 0
      %p98 = por %p96, %p97
      %s99 = ssub.s32 %s16, %s28
      %s100 = ssub.s32 %s17, %s24
      %s101 = sor.u32 %s99, %s100
      %p102 = scmp.eq.s32.totalorder %s101, 0
      %s104 = sadd.s32 %s103, 1
      %s105 = scalar_select %p102, %s103, %s104
      %p108 = pneg %p102
      %p109 = scmp.eq.s32.totalorder %s9, 3
      %p110 = por %p108, %p109
      %p111 = scmp.ne.s32.totalorder %s103, %s106
      %p112 = scmp.eq.s32.totalorder %s9, 0
      %p113 = por %p111, %p112
      %p114 = scmp.ne.s32.totalorder %s103, %s106
      %p115 = scmp.eq.s32.totalorder %s14, 3
      %p116 = por %p114, %p115
      %p117 = scmp.ne.s32.totalorder %s106, %s107
      %p118 = scmp.eq.s32.totalorder %s14, 0
      %p119 = por %p117, %p118
      %p120 = scmp.ne.s32.totalorder %s106, %s107
      %p121 = scmp.eq.s32.totalorder %s15, 3
      %p122 = por %p120, %p121
      %p124 = scmp.ne.s32.totalorder %s107, %s123
      %p125 = scmp.eq.s32.totalorder %s15, 0
      %p126 = por %p124, %p125
      %p127 = scmp.le.s32.totalorder 1, %s9
      %p128 = scmp.lt.s32.totalorder %s9, 5
      %p129 = pnand %p127, %p128
      %p130 = pneg %p129
      // Predicated region
      $region9: #{unet_block_forward.3} parent=5 // pred_check
        _
      $region10: #{unet_block_forward.3} parent=5 // pred_check_branch
        %132 = sbr.rel (%p129) target = $region12
      $region11: #{unet_block_forward.3} parent=5 // pred_region
        %s133 = ssub.s32 %s9, 1
        // Predicated region
        $region13: #{unet_block_forward.3} parent=11 // pred_check
          %p134 = pneg %p70
        $region14: #{unet_block_forward.3} parent=11 // pred_check_branch
          %136 = sbr.rel (%p134) target = $region16
        $region15: #{unet_block_forward.3} parent=11 // pred_region
          _
        $region16: #{unet_block_forward.3} parent=11 // pred_fallthru
          _
        // Predicated region
        $region17: #{unet_block_forward.3} parent=11 // pred_check
          %p137 = pneg %p91
        $region18: #{unet_block_forward.3} parent=11 // pred_check_branch
          %139 = sbr.rel (%p137) target = $region20
        $region19: #{unet_block_forward.3} parent=11 // pred_region
          _
        $region20: #{unet_block_forward.3} parent=11 // pred_fallthru
          _
      $region12: #{unet_block_forward.3} parent=5 // pred_fallthru
        _
      %p140 = scmp.lt.s32.totalorder %s9, 4
      // Predicated region
      $region21: #{unet_block_forward.3} parent=5 // pred_check
        %p141 = pneg %p140
      $region22: #{unet_block_forward.3} parent=5 // pred_check_branch
        %143 = sbr.rel (%p141) target = $region24
      $region23: #{unet_block_forward.3} parent=5 // pred_region
        // Predicated region
        $region25: #{unet_block_forward.3} parent=23 // pred_check
          %p144 = pneg %p43
        $region26: #{unet_block_forward.3} parent=23 // pred_check_branch
          %146 = sbr.rel (%p144) target = $region28
        $region27: #{unet_block_forward.3} parent=23 // pred_region
          %s147 = smul.u32 16, %s17
          %p148 = scmp.lt.s32.totalorder %s16, 1
          %s149 = scalar_select %p148, %s16, 1
          %p150 = scmp.lt.s32.totalorder %s147, 31
          %s151 = scalar_select %p150, %s147, 31
          %s152 = smul.addr %s149, 32
          %s153 = sadd.s32 %s151, %s152
          %s154 = smul.addr %s153, 8
          %s155 = scalar_lea.vmem %s0, %s154
          %s156 = smul.u32 16, %s17
        $region28: #{unet_block_forward.3} parent=23 // pred_fallthru
          _
      $region24: #{unet_block_forward.3} parent=5 // pred_fallthru
        _
      %p157 = scmp.le.s32.totalorder 1, %s9
      %p158 = scmp.lt.s32.totalorder %s9, 5
      %p159 = pnand %p157, %p158
      %p160 = pneg %p159
      // Predicated region
      $region29: #{unet_block_forward.3} parent=5 // pred_check
        _
      $region30: #{unet_block_forward.3} parent=5 // pred_check_branch
        %162 = sbr.rel (%p159) target = $region32
      $region31: #{unet_block_forward.3} parent=5 // pred_region
        %s163 = ssub.s32 %s9, 1
        %s164 = smul.u32 16, %s19
        %p165 = scmp.lt.s32.totalorder %s18, 1
        %s166 = scalar_select %p165, %s18, 1
        %p167 = scmp.lt.s32.totalorder %s164, 31
        %s168 = scalar_select %p167, %s164, 31
        %s169 = smul.addr %s166, 32
        %s170 = sadd.s32 %s168, %s169
        %s171 = smul.addr %s170, 8
        %s172 = scalar_lea.vmem %s0, %s171
        %p173 = pneg %p49
        %p174 = pneg %p46
        %p175 = pneg %p70
        %p176 = pneg %p67
        %p177 = pneg %p91
        %p178 = pneg %p88
        %p179 = pneg %p119
        %p180 = pneg %p116
        %s181 = sand.u32 %s106, 1
        %s182 = sand.u32 %s106, 1
        %s183 = smul.addr %s182, 16
        %s184 = scalar_lea.vmem [#allocation2], %s183
        %s185 = smul.u32 16, %s19
        %p186 = scmp.lt.s32.totalorder %s18, 1
        %s187 = scalar_select %p186, %s18, 1
        %p188 = scmp.lt.s32.totalorder %s185, 31
        %s189 = scalar_select %p188, %s185, 31
        %s190 = smul.addr %s187, 32
        %s191 = sadd.s32 %s189, %s190
        %s192 = smul.addr %s191, 8
        %s193 = scalar_lea.vmem %s0, %s192
        %s194 = smul.u32 16, %s19
        %v195 = vld [vmem:[%s193] sm:$0xff]
        %v196 = vld [vmem:[%s193 + $0x8] sm:$0xff]
        %v197 = vld [vmem:[%s193 + $0x10] sm:$0xff]
        %v198 = vld [vmem:[%s193 + $0x18] sm:$0xff]
        %v199 = vld [vmem:[%s193 + $0x20] sm:$0xff]
        %v200 = vld [vmem:[%s193 + $0x28] sm:$0xff]
        %v201 = vld [vmem:[%s193 + $0x30] sm:$0xff]
        %v202 = vld [vmem:[%s193 + $0x38] sm:$0xff]
        %v203 = vld [vmem:[%s193 + $0x40] sm:$0xff]
        %v204 = vld [vmem:[%s193 + $0x48] sm:$0xff]
        %v205 = vld [vmem:[%s193 + $0x50] sm:$0xff]
        %v206 = vld [vmem:[%s193 + $0x58] sm:$0xff]
        %v207 = vld [vmem:[%s193 + $0x60] sm:$0xff]
        %v208 = vld [vmem:[%s193 + $0x68] sm:$0xff]
        %v209 = vld [vmem:[%s193 + $0x70] sm:$0xff]
        %v210 = vld [vmem:[%s193 + $0x78] sm:$0xff]
        %v211 = vld [vmem:[%s1] sm:$0x1]
        %v213 = vlaneseq
        %v214 = vshrl.u32 %v213, 7
        %v215 = vsub.s32 0, %v214
        %v216 = vrot.slane %v211, %v215
        %v218 = vmul.f32 %v195, %v216
        %v219 = vmul.f32 %v196, %v216
        %v220 = vmul.f32 %v197, %v216
        %v221 = vmul.f32 %v198, %v216
        %v222 = vmul.f32 %v199, %v216
        %v223 = vmul.f32 %v200, %v216
        %v224 = vmul.f32 %v201, %v216
        %v225 = vmul.f32 %v202, %v216
        %v226 = vmul.f32 %v203, %v216
        %v227 = vmul.f32 %v204, %v216
        %v228 = vmul.f32 %v205, %v216
        %v229 = vmul.f32 %v206, %v216
        %v230 = vmul.f32 %v207, %v216
        %v231 = vmul.f32 %v208, %v216
        %v232 = vmul.f32 %v209, %v216
        %v233 = vmul.f32 %v210, %v216
        %v234 = vld [vmem:[%s2] sm:$0x1]
        %v236 = vlaneseq
        %v237 = vshrl.u32 %v236, 7
        %v238 = vsub.s32 0, %v237
        %v239 = vrot.slane %v234, %v238
        %v241 = vadd.f32 %v218, %v239
        %v242 = vadd.f32 %v219, %v239
        %v243 = vadd.f32 %v220, %v239
        %v244 = vadd.f32 %v221, %v239
        %v245 = vadd.f32 %v222, %v239
        %v246 = vadd.f32 %v223, %v239
        %v247 = vadd.f32 %v224, %v239
        %v248 = vadd.f32 %v225, %v239
        %v249 = vadd.f32 %v226, %v239
        %v250 = vadd.f32 %v227, %v239
        %v251 = vadd.f32 %v228, %v239
        %v252 = vadd.f32 %v229, %v239
        %v253 = vadd.f32 %v230, %v239
        %v254 = vadd.f32 %v231, %v239
        %v255 = vadd.f32 %v232, %v239
        %v256 = vadd.f32 %v233, %v239
        %257 = vxpose.xlu0.b32.start [1/16] %v241, 128
        %258 = vxpose.xlu0.b32.cont [2/16] %v242, 128
        %259 = vxpose.xlu0.b32.cont [3/16] %v243, 128
        %260 = vxpose.xlu0.b32.cont [4/16] %v244, 128
        %261 = vxpose.xlu0.b32.cont [5/16] %v245, 128
        %262 = vxpose.xlu0.b32.cont [6/16] %v246, 128
        %263 = vxpose.xlu0.b32.cont [7/16] %v247, 128
        %264 = vxpose.xlu0.b32.cont [8/16] %v248, 128
        %265 = vxpose.xlu0.b32.cont [9/16] %v249, 128
        %266 = vxpose.xlu0.b32.cont [10/16] %v250, 128
        %267 = vxpose.xlu0.b32.cont [11/16] %v251, 128
        %268 = vxpose.xlu0.b32.cont [12/16] %v252, 128
        %269 = vxpose.xlu0.b32.cont [13/16] %v253, 128
        %270 = vxpose.xlu0.b32.cont [14/16] %v254, 128
        %271 = vxpose.xlu0.b32.cont [15/16] %v255, 128
        %272 = vxpose.xlu0.b32.end [16/16] %v256, 128
        %v273 = vpop.trf.xlu0
        %v274 = vpop.trf.xlu0
        %v275 = vpop.trf.xlu0
        %v276 = vpop.trf.xlu0
        %v277 = vpop.trf.xlu0
        %v278 = vpop.trf.xlu0
        %v279 = vpop.trf.xlu0
        %v280 = vpop.trf.xlu0
        %v281 = vpop.trf.xlu0
        %v282 = vpop.trf.xlu0
        %v283 = vpop.trf.xlu0
        %v284 = vpop.trf.xlu0
        %v285 = vpop.trf.xlu0
        %v286 = vpop.trf.xlu0
        %v287 = vpop.trf.xlu0
        %v288 = vpop.trf.xlu0
        %289 = vst [vmem:[%s184] sm:$0xff] %v273
        %290 = vst [vmem:[%s184 + $0x8] sm:$0xff] %v274
        %s291 = sand.u32 %s106, 1
        %s292 = sand.u32 %s106, 1
        %s293 = smul.addr %s292, 16
        %s294 = scalar_lea.vmem [#allocation2], %s293
        // Predicated region
        $region33: #{unet_block_forward.3} parent=31 // pred_check
          %p295 = pneg %p116
        $region34: #{unet_block_forward.3} parent=31 // pred_check_branch
          %297 = sbr.rel (%p295) target = $region36
        $region35: #{unet_block_forward.3} parent=31 // pred_region
          %s298 = smul.addr %s18, 4
          %s299 = sadd.s32 %s19, %s298
          %s300 = smul.addr %s299, 8
          %s301 = scalar_lea.vmem %s3, %s300
          // Predicated region
          $region37: #{unet_block_forward.3} parent=35 // pred_check
            _
          $region38: #{unet_block_forward.3} parent=35 // pred_check_branch
            %303 = sbr.rel (0) target = $region40
          $region39: #{unet_block_forward.3} parent=35 // pred_region
            // Predicated region
            $region41: #{unet_block_forward.3} parent=39 // pred_check
              _
            $region42: #{unet_block_forward.3} parent=39 // pred_check_branch
              %305 = sbr.rel (0) target = $region44
            $region43: #{unet_block_forward.3} parent=39 // pred_region
              // Predicated region
              $region56: #{unet_block_forward.3} parent=43 // pred_check
                _
              $region57: #{unet_block_forward.3} parent=43 // pred_check_branch
                %323 = sbr.rel (0) target = $region59
              $region58: #{unet_block_forward.3} parent=43 // pred_region
                loop: start=0, step=1, limit=1
                $region60: #{unet_block_forward.3} parent=58 // loop_pre_header
                  _
                $region61: #{unet_block_forward.3} parent=58 // loop_header
                  %s325 = sphi 0, %s329
                  %p326 = scmp.ge.s32.totalorder %s325, 1
                  %s330 = sphi %s294, %s294
                  %s331 = sphi %s301, %s301
                $region62: #{unet_block_forward.3} parent=58 // loop_header_branch
                  %328 = sbr.rel (%p326) target = $region66
                $region63: #{unet_block_forward.3} parent=58 // loop_body
                  %v332 = vld [vmem:[%s330] sm:$0xff]
                  %333 = vst [vmem:[%s331] sm:$0xff] %v332
                  %v334 = vld [vmem:[%s330 + $0x8] sm:$0xff]
                  %335 = vst [vmem:[%s331 + $0x10] sm:$0xff] %v334
                $region64: #{unet_block_forward.3} parent=58 // loop_footer
                  %s329 = sadd.s32 1, %s325
                $region65: #{unet_block_forward.3} parent=58 // loop_footer_branch
                  %324 = sbr.rel target = $region61
                $region66: #{unet_block_forward.3} parent=58 // loop_exit
                  _
              $region59: #{unet_block_forward.3} parent=43 // pred_fallthru
                _
              // Predicated region
              $region67: #{unet_block_forward.3} parent=43 // pred_check
                _
              $region68: #{unet_block_forward.3} parent=43 // pred_check_branch
                %337 = sbr.rel target = $region70
              $region69: #{unet_block_forward.3} parent=43 // pred_region
                _
              $region70: #{unet_block_forward.3} parent=43 // pred_fallthru
                _
            $region44: #{unet_block_forward.3} parent=39 // pred_fallthru
              _
            // Predicated region
            $region45: #{unet_block_forward.3} parent=39 // pred_check
              _
            $region46: #{unet_block_forward.3} parent=39 // pred_check_branch
              %307 = sbr.rel target = $region48
            $region47: #{unet_block_forward.3} parent=39 // pred_region
              %s309 = ssub.s32 256, 1
              loop: start=0, step=1, limit=1
              $region49: #{unet_block_forward.3} parent=47 // loop_pre_header
                _
              $region50: #{unet_block_forward.3} parent=47 // loop_header
                %s311 = sphi 0, %s315
                %p312 = scmp.ge.s32.totalorder %s311, 1
                %s316 = sphi %s294, %s294
                %s317 = sphi %s301, %s301
              $region51: #{unet_block_forward.3} parent=47 // loop_header_branch
                %314 = sbr.rel (%p312) target = $region55
              $region52: #{unet_block_forward.3} parent=47 // loop_body
                %v318 = vld [vmem:[%s316] sm:%s309]
                %319 = vst [vmem:[%s317] sm:%s309] %v318
                %v320 = vld [vmem:[%s316 + $0x8] sm:%s309]
                %321 = vst [vmem:[%s317 + $0x10] sm:%s309] %v320
              $region53: #{unet_block_forward.3} parent=47 // loop_footer
                %s315 = sadd.s32 1, %s311
              $region54: #{unet_block_forward.3} parent=47 // loop_footer_branch
                %310 = sbr.rel target = $region50
              $region55: #{unet_block_forward.3} parent=47 // loop_exit
                _
            $region48: #{unet_block_forward.3} parent=39 // pred_fallthru
              _
          $region40: #{unet_block_forward.3} parent=35 // pred_fallthru
            _
          %338 = vnop
        $region36: #{unet_block_forward.3} parent=31 // pred_fallthru
          _
      $region32: #{unet_block_forward.3} parent=5 // pred_fallthru
        _
      %p339 = scmp.le.s32.totalorder 2, %s9
      // Predicated region
      $region71: #{unet_block_forward.3} parent=5 // pred_check
        %p340 = pneg %p339
      $region72: #{unet_block_forward.3} parent=5 // pred_check_branch
        %342 = sbr.rel (%p340) target = $region74
      $region73: #{unet_block_forward.3} parent=5 // pred_region
        %s343 = ssub.s32 %s9, 2
        // Predicated region
        $region75: #{unet_block_forward.3} parent=73 // pred_check
          %p344 = pneg %p122
        $region76: #{unet_block_forward.3} parent=73 // pred_check_branch
          %346 = sbr.rel (%p344) target = $region78
        $region77: #{unet_block_forward.3} parent=73 // pred_region
          %s347 = sand.u32 %s107, 1
          %s348 = sand.u32 %s107, 1
          %s349 = smul.addr %s348, 16
          %s350 = scalar_lea.vmem [#allocation2], %s349
        $region78: #{unet_block_forward.3} parent=73 // pred_fallthru
          _
      $region74: #{unet_block_forward.3} parent=5 // pred_fallthru
        _
    $region6: #{unet_block_forward.3} parent=1 // loop_footer
      %s13 = sadd.s32 1, %s9
    $region7: #{unet_block_forward.3} parent=1 // loop_footer_branch
      %8 = sbr.rel target = $region3
    $region8: #{unet_block_forward.3} parent=1 // loop_exit
      _

// kernel: unet_block_forward.2
$region0: #{unet_block_forward.2}
  #allocation0 [shape = 'u32[]', space=smem, size = 0x4, offset = 0x4, fixed_abs, tag = 'smem constant byte address 0x4 - core index']
  #allocation1 [shape = 'u32[144,128]{1,0:T(1,128)}', space=vmem, size = 0x12000, scoped, tag = 'internal scratch']
  %s0 = inlined_call_operand.vmem [shape: f32[16,64], index: 0, kind: input, shape index: {}]
  %s1 = inlined_call_operand.vmem [shape: f32[16,256], index: 1, kind: input, shape index: {}]
  %s2 = inlined_call_operand.vmem [shape: f32[64,512], index: 2, kind: input, shape index: {}]
  %s3 = inlined_call_operand.vmem [shape: f32[256,512], index: 3, kind: input, shape index: {}]
  %s4 = inlined_call_operand.vmem [shape: f32[1,512], index: 4, kind: input, shape index: {}]
  %s5 = inlined_call_operand.vmem [shape: f32[16,512], index: 5, kind: output, shape index: {0}]
  %s6 = inlined_call_operand.vmem [shape: f32[16,512], index: 6, kind: output, shape index: {1}]
  %7 = xla_tuple %s5, %s6
  %s8 = sld [smem:[#allocation0]]
  $region61: #{unet_block_forward.2} parent=0
    _
  %s10 = ssub.s32 1, %s8
  %s11 = scalar_select 0, %s10, %s8
  loop: start=0, step=1, limit=4
  $region2: #{unet_block_forward.2} parent=0 // loop_pre_header
    _
  $region3: #{unet_block_forward.2} parent=0 // loop_header
    %s13 = sphi 0, %s17
    %p14 = scmp.ge.s32.totalorder %s13, 4
    %s23 = sphi 0, %s25
    %s26 = sphi 0, %s23
    %s27 = sphi 0, %s26
    %s43 = sphi 0, %s27
    %s49 = sphi 0, %s51
    %s52 = sphi 0, %s49
    %s53 = sphi 0, %s52
    %s69 = sphi 0, %s53
    %s73 = sphi 0, %s73
    %s75 = sphi 0, %s73
    %s76 = sphi 0, %s75
    %s90 = sphi 0, %s76
    %s94 = sphi 0, %s94
    %s96 = sphi 0, %s94
    %s97 = sphi 0, %s96
    %s111 = sphi 0, %s97
    %s115 = sphi 0, %s115
    %s117 = sphi 0, %s115
    %s118 = sphi 0, %s117
    %s132 = sphi 0, %s118
    %s138 = sphi 0, %s140
    %s141 = sphi 0, %s138
    %s142 = sphi 0, %s141
    %s158 = sphi 0, %s142
    %s164 = sphi 0, %s166
    %s167 = sphi 0, %s164
    %s168 = sphi 0, %s167
    %s184 = sphi 0, %s168
  $region4: #{unet_block_forward.2} parent=0 // loop_header_branch
    %16 = sbr.rel (%p14) target = $region8
  $region5: #{unet_block_forward.2} parent=0 // loop_body
    %s18 = ssub.s32 %s13, 1
    %s19 = ssub.s32 %s13, 2
    %s20 = sadd.s32 %s13, 1
    %s21 = ssub.s32 %s13, %s20
    %p22 = scmp.eq.s32.totalorder %s21, 0
    %s24 = sadd.s32 %s23, 1
    %s25 = scalar_select %p22, %s23, %s24
    %p28 = pneg %p22
    %p29 = scmp.eq.s32.totalorder %s13, 1
    %p30 = por %p28, %p29
    %p31 = scmp.ne.s32.totalorder %s23, %s26
    %p32 = scmp.eq.s32.totalorder %s13, 0
    %p33 = por %p31, %p32
    %p34 = scmp.ne.s32.totalorder %s23, %s26
    %p35 = scmp.eq.s32.totalorder %s18, 1
    %p36 = por %p34, %p35
    %p37 = scmp.ne.s32.totalorder %s26, %s27
    %p38 = scmp.eq.s32.totalorder %s18, 0
    %p39 = por %p37, %p38
    %p40 = scmp.ne.s32.totalorder %s26, %s27
    %p41 = scmp.eq.s32.totalorder %s19, 1
    %p42 = por %p40, %p41
    %p44 = scmp.ne.s32.totalorder %s27, %s43
    %p45 = scmp.eq.s32.totalorder %s19, 0
    %p46 = por %p44, %p45
    %s47 = ssub.s32 %s13, %s20
    %p48 = scmp.eq.s32.totalorder %s47, 0
    %s50 = sadd.s32 %s49, 1
    %s51 = scalar_select %p48, %s49, %s50
    %p54 = pneg %p48
    %p55 = scmp.eq.s32.totalorder %s13, 1
    %p56 = por %p54, %p55
    %p57 = scmp.ne.s32.totalorder %s49, %s52
    %p58 = scmp.eq.s32.totalorder %s13, 0
    %p59 = por %p57, %p58
    %p60 = scmp.ne.s32.totalorder %s49, %s52
    %p61 = scmp.eq.s32.totalorder %s18, 1
    %p62 = por %p60, %p61
    %p63 = scmp.ne.s32.totalorder %s52, %s53
    %p64 = scmp.eq.s32.totalorder %s18, 0
    %p65 = por %p63, %p64
    %p66 = scmp.ne.s32.totalorder %s52, %s53
    %p67 = scmp.eq.s32.totalorder %s19, 1
    %p68 = por %p66, %p67
    %p70 = scmp.ne.s32.totalorder %s53, %s69
    %p71 = scmp.eq.s32.totalorder %s19, 0
    %p72 = por %p70, %p71
    %s74 = sadd.s32 %s73, 1
    %p77 = scmp.eq.s32.totalorder %s13, 1
    %p78 = scmp.ne.s32.totalorder %s73, %s75
    %p79 = scmp.eq.s32.totalorder %s13, 0
    %p80 = por %p78, %p79
    %p81 = scmp.ne.s32.totalorder %s73, %s75
    %p82 = scmp.eq.s32.totalorder %s18, 1
    %p83 = por %p81, %p82
    %p84 = scmp.ne.s32.totalorder %s75, %s76
    %p85 = scmp.eq.s32.totalorder %s18, 0
    %p86 = por %p84, %p85
    %p87 = scmp.ne.s32.totalorder %s75, %s76
    %p88 = scmp.eq.s32.totalorder %s19, 1
    %p89 = por %p87, %p88
    %p91 = scmp.ne.s32.totalorder %s76, %s90
    %p92 = scmp.eq.s32.totalorder %s19, 0
    %p93 = por %p91, %p92
    %s95 = sadd.s32 %s94, 1
    %p98 = scmp.eq.s32.totalorder %s13, 1
    %p99 = scmp.ne.s32.totalorder %s94, %s96
    %p100 = scmp.eq.s32.totalorder %s13, 0
    %p101 = por %p99, %p100
    %p102 = scmp.ne.s32.totalorder %s94, %s96
    %p103 = scmp.eq.s32.totalorder %s18, 1
    %p104 = por %p102, %p103
    %p105 = scmp.ne.s32.totalorder %s96, %s97
    %p106 = scmp.eq.s32.totalorder %s18, 0
    %p107 = por %p105, %p106
    %p108 = scmp.ne.s32.totalorder %s96, %s97
    %p109 = scmp.eq.s32.totalorder %s19, 1
    %p110 = por %p108, %p109
    %p112 = scmp.ne.s32.totalorder %s97, %s111
    %p113 = scmp.eq.s32.totalorder %s19, 0
    %p114 = por %p112, %p113
    %s116 = sadd.s32 %s115, 1
    %p119 = scmp.eq.s32.totalorder %s13, 1
    %p120 = scmp.ne.s32.totalorder %s115, %s117
    %p121 = scmp.eq.s32.totalorder %s13, 0
    %p122 = por %p120, %p121
    %p123 = scmp.ne.s32.totalorder %s115, %s117
    %p124 = scmp.eq.s32.totalorder %s18, 1
    %p125 = por %p123, %p124
    %p126 = scmp.ne.s32.totalorder %s117, %s118
    %p127 = scmp.eq.s32.totalorder %s18, 0
    %p128 = por %p126, %p127
    %p129 = scmp.ne.s32.totalorder %s117, %s118
    %p130 = scmp.eq.s32.totalorder %s19, 1
    %p131 = por %p129, %p130
    %p133 = scmp.ne.s32.totalorder %s118, %s132
    %p134 = scmp.eq.s32.totalorder %s19, 0
    %p135 = por %p133, %p134
    %s136 = ssub.s32 %s13, %s20
    %p137 = scmp.eq.s32.totalorder %s136, 0
    %s139 = sadd.s32 %s138, 1
    %s140 = scalar_select %p137, %s138, %s139
    %p143 = pneg %p137
    %p144 = scmp.eq.s32.totalorder %s13, 1
    %p145 = por %p143, %p144
    %p146 = scmp.ne.s32.totalorder %s138, %s141
    %p147 = scmp.eq.s32.totalorder %s13, 0
    %p148 = por %p146, %p147
    %p149 = scmp.ne.s32.totalorder %s138, %s141
    %p150 = scmp.eq.s32.totalorder %s18, 1
    %p151 = por %p149, %p150
    %p152 = scmp.ne.s32.totalorder %s141, %s142
    %p153 = scmp.eq.s32.totalorder %s18, 0
    %p154 = por %p152, %p153
    %p155 = scmp.ne.s32.totalorder %s141, %s142
    %p156 = scmp.eq.s32.totalorder %s19, 1
    %p157 = por %p155, %p156
    %p159 = scmp.ne.s32.totalorder %s142, %s158
    %p160 = scmp.eq.s32.totalorder %s19, 0
    %p161 = por %p159, %p160
    %s162 = ssub.s32 %s13, %s20
    %p163 = scmp.eq.s32.totalorder %s162, 0
    %s165 = sadd.s32 %s164, 1
    %s166 = scalar_select %p163, %s164, %s165
    %p169 = pneg %p163
    %p170 = scmp.eq.s32.totalorder %s13, 1
    %p171 = por %p169, %p170
    %p172 = scmp.ne.s32.totalorder %s164, %s167
    %p173 = scmp.eq.s32.totalorder %s13, 0
    %p174 = por %p172, %p173
    %p175 = scmp.ne.s32.totalorder %s164, %s167
    %p176 = scmp.eq.s32.totalorder %s18, 1
    %p177 = por %p175, %p176
    %p178 = scmp.ne.s32.totalorder %s167, %s168
    %p179 = scmp.eq.s32.totalorder %s18, 0
    %p180 = por %p178, %p179
    %p181 = scmp.ne.s32.totalorder %s167, %s168
    %p182 = scmp.eq.s32.totalorder %s19, 1
    %p183 = por %p181, %p182
    %p185 = scmp.ne.s32.totalorder %s168, %s184
    %p186 = scmp.eq.s32.totalorder %s19, 0
    %p187 = por %p185, %p186
    %p188 = scmp.le.s32.totalorder 1, %s13
    %p189 = scmp.lt.s32.totalorder %s13, 3
    %p190 = pnand %p188, %p189
    %p191 = pneg %p190
    // Predicated region
    $region9: #{unet_block_forward.2} parent=5 // pred_check
      _
    $region10: #{unet_block_forward.2} parent=5 // pred_check_branch
      %193 = sbr.rel (%p190) target = $region12
    $region11: #{unet_block_forward.2} parent=5 // pred_region
      %s194 = ssub.s32 %s13, 1
      // Predicated region
      $region13: #{unet_block_forward.2} parent=11 // pred_check
        %p195 = pneg %p86
      $region14: #{unet_block_forward.2} parent=11 // pred_check_branch
        %197 = sbr.rel (%p195) target = $region16
      $region15: #{unet_block_forward.2} parent=11 // pred_region
        _
      $region16: #{unet_block_forward.2} parent=11 // pred_fallthru
        _
      // Predicated region
      $region17: #{unet_block_forward.2} parent=11 // pred_check
        %p198 = pneg %p107
      $region18: #{unet_block_forward.2} parent=11 // pred_check_branch
        %200 = sbr.rel (%p198) target = $region20
      $region19: #{unet_block_forward.2} parent=11 // pred_region
        _
      $region20: #{unet_block_forward.2} parent=11 // pred_fallthru
        _
      // Predicated region
      $region21: #{unet_block_forward.2} parent=11 // pred_check
        %p201 = pneg %p128
      $region22: #{unet_block_forward.2} parent=11 // pred_check_branch
        %203 = sbr.rel (%p201) target = $region24
      $region23: #{unet_block_forward.2} parent=11 // pred_region
        _
      $region24: #{unet_block_forward.2} parent=11 // pred_fallthru
        _
    $region12: #{unet_block_forward.2} parent=5 // pred_fallthru
      _
    %p204 = scmp.lt.s32.totalorder %s13, 2
    // Predicated region
    $region25: #{unet_block_forward.2} parent=5 // pred_check
      %p205 = pneg %p204
    $region26: #{unet_block_forward.2} parent=5 // pred_check_branch
      %207 = sbr.rel (%p205) target = $region28
    $region27: #{unet_block_forward.2} parent=5 // pred_region
      // Predicated region
      $region29: #{unet_block_forward.2} parent=27 // pred_check
        %p208 = pneg %p33
      $region30: #{unet_block_forward.2} parent=27 // pred_check_branch
        %210 = sbr.rel (%p208) target = $region32
      $region31: #{unet_block_forward.2} parent=27 // pred_region
        %p211 = scmp.lt.s32.totalorder %s13, 1
        %s212 = scalar_select %p211, %s13, 1
        %s213 = smul.addr %s212, 8
        %s214 = scalar_lea.vmem %s0, %s213
      $region32: #{unet_block_forward.2} parent=27 // pred_fallthru
        _
      // Predicated region
      $region33: #{unet_block_forward.2} parent=27 // pred_check
        %p215 = pneg %p59
      $region34: #{unet_block_forward.2} parent=27 // pred_check_branch
        %217 = sbr.rel (%p215) target = $region36
      $region35: #{unet_block_forward.2} parent=27 // pred_region
        %p218 = scmp.lt.s32.totalorder %s13, 1
        %s219 = scalar_select %p218, %s13, 1
        %s220 = smul.addr %s219, 2
        %s221 = smul.addr %s220, 8
        %s222 = scalar_lea.vmem %s1, %s221
      $region36: #{unet_block_forward.2} parent=27 // pred_fallthru
        _
    $region28: #{unet_block_forward.2} parent=5 // pred_fallthru
      _
    %p223 = scmp.le.s32.totalorder 1, %s13
    %p224 = scmp.lt.s32.totalorder %s13, 3
    %p225 = pnand %p223, %p224
    %p226 = pneg %p225
    // Predicated region
    $region37: #{unet_block_forward.2} parent=5 // pred_check
      _
    $region38: #{unet_block_forward.2} parent=5 // pred_check_branch
      %228 = sbr.rel (%p225) target = $region40
    $region39: #{unet_block_forward.2} parent=5 // pred_region
      %s229 = ssub.s32 %s13, 1
      %p230 = scmp.lt.s32.totalorder %s18, 1
      %s231 = scalar_select %p230, %s18, 1
      %s232 = smul.addr %s231, 8
      %s233 = scalar_lea.vmem %s0, %s232
      %p234 = pneg %p39
      %p235 = pneg %p36
      %p236 = scmp.lt.s32.totalorder %s18, 1
      %s237 = scalar_select %p236, %s18, 1
      %s238 = smul.addr %s237, 2
      %s239 = smul.addr %s238, 8
      %s240 = scalar_lea.vmem %s1, %s239
      %p241 = pneg %p65
      %p242 = pneg %p62
      %p243 = pneg %p86
      %p244 = pneg %p83
      %p245 = pneg %p107
      %p246 = pneg %p104
      %p247 = pneg %p128
      %p248 = pneg %p125
      %p249 = pneg %p154
      %p250 = pneg %p151
      %p251 = scmp.lt.s32.totalorder %s18, 1
      %s252 = scalar_select %p251, %s18, 1
      %s253 = smul.addr %s252, 4
      %s254 = smul.addr %s253, 8
      %s255 = scalar_lea.vmem %s5, %s254
      %p256 = pneg %p180
      %p257 = pneg %p177
      %p258 = scmp.lt.s32.totalorder %s18, 1
      %s259 = scalar_select %p258, %s18, 1
      %s260 = smul.addr %s259, 4
      %s261 = smul.addr %s260, 8
      %s262 = scalar_lea.vmem %s6, %s261
      %p263 = scmp.lt.s32.totalorder %s18, 1
      %s264 = scalar_select %p263, %s18, 1
      %s265 = smul.addr %s264, 8
      %s266 = scalar_lea.vmem %s0, %s265
      %p267 = scmp.lt.s32.totalorder %s18, 1
      %s268 = scalar_select %p267, %s18, 1
      %s269 = smul.addr %s268, 2
      %s270 = smul.addr %s269, 8
      %s271 = scalar_lea.vmem %s1, %s270
      %p272 = scmp.lt.s32.totalorder %s18, 1
      %s273 = scalar_select %p272, %s18, 1
      %s274 = smul.addr %s273, 4
      %s275 = smul.addr %s274, 8
      %s276 = scalar_lea.vmem %s5, %s275
      %p277 = scmp.lt.s32.totalorder %s18, 1
      %s278 = scalar_select %p277, %s18, 1
      %s279 = smul.addr %s278, 4
      %s280 = smul.addr %s279, 8
      %s281 = scalar_lea.vmem %s6, %s280
      %v282 = vld [vmem:[%s266] sm:$0xff]
      %v283 = vld [vmem:[%s2] sm:$0xff]
      %v284 = vld [vmem:[%s2 + $0x8] sm:$0xff]
      %v285 = vld [vmem:[%s2 + $0x10] sm:$0xff]
      %v286 = vld [vmem:[%s2 + $0x18] sm:$0xff]
      %v287 = vld [vmem:[%s2 + $0x20] sm:$0xff]
      %v288 = vld [vmem:[%s2 + $0x28] sm:$0xff]
      %v289 = vld [vmem:[%s2 + $0x30] sm:$0xff]
      %v290 = vld [vmem:[%s2 + $0x38] sm:$0xff]
      %v291 = vld [vmem:[%s2 + $0x40] sm:$0xff]
      %v292 = vld [vmem:[%s2 + $0x48] sm:$0xff]
      %v293 = vld [vmem:[%s2 + $0x50] sm:$0xff]
      %v294 = vld [vmem:[%s2 + $0x58] sm:$0xff]
      %v295 = vld [vmem:[%s2 + $0x60] sm:$0xff]
      %v296 = vld [vmem:[%s2 + $0x68] sm:$0xff]
      %v297 = vld [vmem:[%s2 + $0x70] sm:$0xff]
      %v298 = vld [vmem:[%s2 + $0x78] sm:$0xff]
      %v299 = vld [vmem:[%s2 + $0x80] sm:$0xff]
      %v300 = vld [vmem:[%s2 + $0x88] sm:$0xff]
      %v301 = vld [vmem:[%s2 + $0x90] sm:$0xff]
      %v302 = vld [vmem:[%s2 + $0x98] sm:$0xff]
      %v303 = vld [vmem:[%s2 + $0xa0] sm:$0xff]
      %v304 = vld [vmem:[%s2 + $0xa8] sm:$0xff]
      %v305 = vld [vmem:[%s2 + $0xb0] sm:$0xff]
      %v306 = vld [vmem:[%s2 + $0xb8] sm:$0xff]
      %v307 = vld [vmem:[%s2 + $0xc0] sm:$0xff]
      %v308 = vld [vmem:[%s2 + $0xc8] sm:$0xff]
      %v309 = vld [vmem:[%s2 + $0xd0] sm:$0xff]
      %v310 = vld [vmem:[%s2 + $0xd8] sm:$0xff]
      %v311 = vld [vmem:[%s2 + $0xe0] sm:$0xff]
      %v312 = vld [vmem:[%s2 + $0xe8] sm:$0xff]
      %v313 = vld [vmem:[%s2 + $0xf0] sm:$0xff]
      %v314 = vld [vmem:[%s2 + $0xf8] sm:$0xff]
      %v315 = vld [vmem:[%s271] sm:$0xff]
      %v316 = vld [vmem:[%s271 + $0x8] sm:$0xff]
      %v317 = vld [vmem:[%s3] sm:$0xff]
      %v318 = vld [vmem:[%s3 + $0x8] sm:$0xff]
      %v319 = vld [vmem:[%s3 + $0x10] sm:$0xff]
      %v320 = vld [vmem:[%s3 + $0x18] sm:$0xff]
      %v321 = vld [vmem:[%s3 + $0x20] sm:$0xff]
      %v322 = vld [vmem:[%s3 + $0x28] sm:$0xff]
      %v323 = vld [vmem:[%s3 + $0x30] sm:$0xff]
      %v324 = vld [vmem:[%s3 + $0x38] sm:$0xff]
      %v325 = vld [vmem:[%s3 + $0x40] sm:$0xff]
      %v326 = vld [vmem:[%s3 + $0x48] sm:$0xff]
      %v327 = vld [vmem:[%s3 + $0x50] sm:$0xff]
      %v328 = vld [vmem:[%s3 + $0x58] sm:$0xff]
      %v329 = vld [vmem:[%s3 + $0x60] sm:$0xff]
      %v330 = vld [vmem:[%s3 + $0x68] sm:$0xff]
      %v331 = vld [vmem:[%s3 + $0x70] sm:$0xff]
      %v332 = vld [vmem:[%s3 + $0x78] sm:$0xff]
      %v333 = vld [vmem:[%s3 + $0x80] sm:$0xff]
      %v334 = vld [vmem:[%s3 + $0x88] sm:$0xff]
      %v335 = vld [vmem:[%s3 + $0x90] sm:$0xff]
      %v336 = vld [vmem:[%s3 + $0x98] sm:$0xff]
      %v337 = vld [vmem:[%s3 + $0xa0] sm:$0xff]
      %v338 = vld [vmem:[%s3 + $0xa8] sm:$0xff]
      %v339 = vld [vmem:[%s3 + $0xb0] sm:$0xff]
      %v340 = vld [vmem:[%s3 + $0xb8] sm:$0xff]
      %v341 = vld [vmem:[%s3 + $0xc0] sm:$0xff]
      %v342 = vld [vmem:[%s3 + $0xc8] sm:$0xff]
      %v343 = vld [vmem:[%s3 + $0xd0] sm:$0xff]
      %v344 = vld [vmem:[%s3 + $0xd8] sm:$0xff]
      %v345 = vld [vmem:[%s3 + $0xe0] sm:$0xff]
      %v346 = vld [vmem:[%s3 + $0xe8] sm:$0xff]
      %v347 = vld [vmem:[%s3 + $0xf0] sm:$0xff]
      %v348 = vld [vmem:[%s3 + $0xf8] sm:$0xff]
      %v349 = vld [vmem:[%s3 + $0x100] sm:$0xff]
      %v350 = vld [vmem:[%s3 + $0x108] sm:$0xff]
      %v351 = vld [vmem:[%s3 + $0x110] sm:$0xff]
      %v352 = vld [vmem:[%s3 + $0x118] sm:$0xff]
      %v353 = vld [vmem:[%s3 + $0x120] sm:$0xff]
      %v354 = vld [vmem:[%s3 + $0x128] sm:$0xff]
      %v355 = vld [vmem:[%s3 + $0x130] sm:$0xff]
      %v356 = vld [vmem:[%s3 + $0x138] sm:$0xff]
      %v357 = vld [vmem:[%s3 + $0x140] sm:$0xff]
      %v358 = vld [vmem:[%s3 + $0x148] sm:$0xff]
      %v359 = vld [vmem:[%s3 + $0x150] sm:$0xff]
      %v360 = vld [vmem:[%s3 + $0x158] sm:$0xff]
      %v361 = vld [vmem:[%s3 + $0x160] sm:$0xff]
      %v362 = vld [vmem:[%s3 + $0x168] sm:$0xff]
      %v363 = vld [vmem:[%s3 + $0x170] sm:$0xff]
      %v364 = vld [vmem:[%s3 + $0x178] sm:$0xff]
      %v365 = vld [vmem:[%s3 + $0x180] sm:$0xff]
      %v366 = vld [vmem:[%s3 + $0x188] sm:$0xff]
      %v367 = vld [vmem:[%s3 + $0x190] sm:$0xff]
      %v368 = vld [vmem:[%s3 + $0x198] sm:$0xff]
      %v369 = vld [vmem:[%s3 + $0x1a0] sm:$0xff]
      %v370 = vld [vmem:[%s3 + $0x1a8] sm:$0xff]
      %v371 = vld [vmem:[%s3 + $0x1b0] sm:$0xff]
      %v372 = vld [vmem:[%s3 + $0x1b8] sm:$0xff]
      %v373 = vld [vmem:[%s3 + $0x1c0] sm:$0xff]
      %v374 = vld [vmem:[%s3 + $0x1c8] sm:$0xff]
      %v375 = vld [vmem:[%s3 + $0x1d0] sm:$0xff]
      %v376 = vld [vmem:[%s3 + $0x1d8] sm:$0xff]
      %v377 = vld [vmem:[%s3 + $0x1e0] sm:$0xff]
      %v378 = vld [vmem:[%s3 + $0x1e8] sm:$0xff]
      %v379 = vld [vmem:[%s3 + $0x1f0] sm:$0xff]
      %v380 = vld [vmem:[%s3 + $0x1f8] sm:$0xff]
      %v381 = vld [vmem:[%s3 + $0x200] sm:$0xff]
      %v382 = vld [vmem:[%s3 + $0x208] sm:$0xff]
      %v383 = vld [vmem:[%s3 + $0x210] sm:$0xff]
      %v384 = vld [vmem:[%s3 + $0x218] sm:$0xff]
      %v385 = vld [vmem:[%s3 + $0x220] sm:$0xff]
      %v386 = vld [vmem:[%s3 + $0x228] sm:$0xff]
      %v387 = vld [vmem:[%s3 + $0x230] sm:$0xff]
      %v388 = vld [vmem:[%s3 + $0x238] sm:$0xff]
      %v389 = vld [vmem:[%s3 + $0x240] sm:$0xff]
      %v390 = vld [vmem:[%s3 + $0x248] sm:$0xff]
      %v391 = vld [vmem:[%s3 + $0x250] sm:$0xff]
      %v392 = vld [vmem:[%s3 + $0x258] sm:$0xff]
      %v393 = vld [vmem:[%s3 + $0x260] sm:$0xff]
      %v394 = vld [vmem:[%s3 + $0x268] sm:$0xff]
      %v395 = vld [vmem:[%s3 + $0x270] sm:$0xff]
      %v396 = vld [vmem:[%s3 + $0x278] sm:$0xff]
      %v397 = vld [vmem:[%s3 + $0x280] sm:$0xff]
      %v398 = vld [vmem:[%s3 + $0x288] sm:$0xff]
      %v399 = vld [vmem:[%s3 + $0x290] sm:$0xff]
      %v400 = vld [vmem:[%s3 + $0x298] sm:$0xff]
      %v401 = vld [vmem:[%s3 + $0x2a0] sm:$0xff]
      %v402 = vld [vmem:[%s3 + $0x2a8] sm:$0xff]
      %v403 = vld [vmem:[%s3 + $0x2b0] sm:$0xff]
      %v404 = vld [vmem:[%s3 + $0x2b8] sm:$0xff]
      %v405 = vld [vmem:[%s3 + $0x2c0] sm:$0xff]
      %v406 = vld [vmem:[%s3 + $0x2c8] sm:$0xff]
      %v407 = vld [vmem:[%s3 + $0x2d0] sm:$0xff]
      %v408 = vld [vmem:[%s3 + $0x2d8] sm:$0xff]
      %v409 = vld [vmem:[%s3 + $0x2e0] sm:$0xff]
      %v410 = vld [vmem:[%s3 + $0x2e8] sm:$0xff]
      %v411 = vld [vmem:[%s3 + $0x2f0] sm:$0xff]
      %v412 = vld [vmem:[%s3 + $0x2f8] sm:$0xff]
      %v413 = vld [vmem:[%s3 + $0x300] sm:$0xff]
      %v414 = vld [vmem:[%s3 + $0x308] sm:$0xff]
      %v415 = vld [vmem:[%s3 + $0x310] sm:$0xff]
      %v416 = vld [vmem:[%s3 + $0x318] sm:$0xff]
      %v417 = vld [vmem:[%s3 + $0x320] sm:$0xff]
      %v418 = vld [vmem:[%s3 + $0x328] sm:$0xff]
      %v419 = vld [vmem:[%s3 + $0x330] sm:$0xff]
      %v420 = vld [vmem:[%s3 + $0x338] sm:$0xff]
      %v421 = vld [vmem:[%s3 + $0x340] sm:$0xff]
      %v422 = vld [vmem:[%s3 + $0x348] sm:$0xff]
      %v423 = vld [vmem:[%s3 + $0x350] sm:$0xff]
      %v424 = vld [vmem:[%s3 + $0x358] sm:$0xff]
      %v425 = vld [vmem:[%s3 + $0x360] sm:$0xff]
      %v426 = vld [vmem:[%s3 + $0x368] sm:$0xff]
      %v427 = vld [vmem:[%s3 + $0x370] sm:$0xff]
      %v428 = vld [vmem:[%s3 + $0x378] sm:$0xff]
      %v429 = vld [vmem:[%s3 + $0x380] sm:$0xff]
      %v430 = vld [vmem:[%s3 + $0x388] sm:$0xff]
      %v431 = vld [vmem:[%s3 + $0x390] sm:$0xff]
      %v432 = vld [vmem:[%s3 + $0x398] sm:$0xff]
      %v433 = vld [vmem:[%s3 + $0x3a0] sm:$0xff]
      %v434 = vld [vmem:[%s3 + $0x3a8] sm:$0xff]
      %v435 = vld [vmem:[%s3 + $0x3b0] sm:$0xff]
      %v436 = vld [vmem:[%s3 + $0x3b8] sm:$0xff]
      %v437 = vld [vmem:[%s3 + $0x3c0] sm:$0xff]
      %v438 = vld [vmem:[%s3 + $0x3c8] sm:$0xff]
      %v439 = vld [vmem:[%s3 + $0x3d0] sm:$0xff]
      %v440 = vld [vmem:[%s3 + $0x3d8] sm:$0xff]
      %v441 = vld [vmem:[%s3 + $0x3e0] sm:$0xff]
      %v442 = vld [vmem:[%s3 + $0x3e8] sm:$0xff]
      %v443 = vld [vmem:[%s3 + $0x3f0] sm:$0xff]
      %v444 = vld [vmem:[%s3 + $0x3f8] sm:$0xff]
      %445 = vmatprep.subr.mxu0 %v378
      %446 = vmatpush1.msra.mxu0 %v377
      %447 = vmatprep.subr.mxu0 %v374
      %448 = vmatpush1.msra.mxu0 %v373
      %449 = vmatprep.subr.mxu0 %v370
      %450 = vmatpush1.msra.mxu0 %v369
      %451 = vmatprep.subr.mxu0 %v366
      %452 = vmatpush1.msra.mxu0 %v365
      %453 = vmatprep.subr.mxu0 %v362
      %454 = vmatpush1.msra.mxu0 %v361
      %455 = vmatprep.subr.mxu0 %v358
      %456 = vmatpush1.msra.mxu0 %v357
      %457 = vmatprep.subr.mxu0 %v354
      %458 = vmatpush1.msra.mxu0 %v353
      %459 = vmatprep.subr.mxu0 %v350
      %460 = vmatpush1.msra.mxu0 %v349
      %461 = vmatprep.subr.mxu0 %v346
      %462 = vmatpush1.msra.mxu0 %v345
      %463 = vmatprep.subr.mxu0 %v342
      %464 = vmatpush1.msra.mxu0 %v341
      %465 = vmatprep.subr.mxu0 %v338
      %466 = vmatpush1.msra.mxu0 %v337
      %467 = vmatprep.subr.mxu0 %v334
      %468 = vmatpush1.msra.mxu0 %v333
      %469 = vmatprep.subr.mxu0 %v330
      %470 = vmatpush1.msra.mxu0 %v329
      %471 = vmatprep.subr.mxu0 %v326
      %472 = vmatpush1.msra.mxu0 %v325
      %473 = vmatprep.subr.mxu0 %v322
      %474 = vmatpush1.msra.mxu0 %v321
      %475 = vmatprep.subr.mxu0 %v318
      %476 = vmatpush1.msra.mxu0 %v317
      %477 = vmatprep.subr.mxu0 %v442
      %478 = vmatpush2.msra.mxu0 %v441
      %479 = vmatprep.subr.mxu0 %v438
      %480 = vmatpush2.msra.mxu0 %v437
      %481 = vmatprep.subr.mxu0 %v434
      %482 = vmatpush2.msra.mxu0 %v433
      %483 = vmatprep.subr.mxu0 %v430
      %484 = vmatpush2.msra.mxu0 %v429
      %485 = vmatprep.subr.mxu0 %v426
      %486 = vmatpush2.msra.mxu0 %v425
      %487 = vmatprep.subr.mxu0 %v422
      %488 = vmatpush2.msra.mxu0 %v421
      %489 = vmatprep.subr.mxu0 %v418
      %490 = vmatpush2.msra.mxu0 %v417
      %491 = vmatprep.subr.mxu0 %v414
      %492 = vmatpush2.msra.mxu0 %v413
      %493 = vmatprep.subr.mxu0 %v410
      %494 = vmatpush2.msra.mxu0 %v409
      %495 = vmatprep.subr.mxu0 %v406
      %496 = vmatpush2.msra.mxu0 %v405
      %497 = vmatprep.subr.mxu0 %v402
      %498 = vmatpush2.msra.mxu0 %v401
      %499 = vmatprep.subr.mxu0 %v398
      %500 = vmatpush2.msra.mxu0 %v397
      %501 = vmatprep.subr.mxu0 %v394
      %502 = vmatpush2.msra.mxu0 %v393
      %503 = vmatprep.subr.mxu0 %v390
      %504 = vmatpush2.msra.mxu0 %v389
      %505 = vmatprep.subr.mxu0 %v386
      %506 = vmatpush2.msra.mxu0 %v385
      %507 = vmatprep.subr.mxu0 %v382
      %508 = vmatpush2.msra.mxu0 %v381
      %509 = vmatprep.mubr.f32.mxu0 %v316
      %510 = vmatmul.mubr.f32.gmra.mxu0 %v315
      %v511 = vpop.f32.mrf.mxu0
      %v512 = vadd.f32 0.0, %v511
      %v513 = vpop.f32.mrf.mxu0
      %v514 = vadd.f32 0.0, %v513
      %515 = vdwg.mxu0
      %516 = vmatprep.subr.mxu0 %v380
      %517 = vmatpush1.msra.mxu0 %v379
      %518 = vmatprep.subr.mxu0 %v376
      %519 = vmatpush1.msra.mxu0 %v375
      %520 = vmatprep.subr.mxu0 %v372
      %521 = vmatpush1.msra.mxu0 %v371
      %522 = vmatprep.subr.mxu0 %v368
      %523 = vmatpush1.msra.mxu0 %v367
      %524 = vmatprep.subr.mxu0 %v364
      %525 = vmatpush1.msra.mxu0 %v363
      %526 = vmatprep.subr.mxu0 %v360
      %527 = vmatpush1.msra.mxu0 %v359
      %528 = vmatprep.subr.mxu0 %v356
      %529 = vmatpush1.msra.mxu0 %v355
      %530 = vmatprep.subr.mxu0 %v352
      %531 = vmatpush1.msra.mxu0 %v351
      %532 = vmatprep.subr.mxu0 %v348
      %533 = vmatpush1.msra.mxu0 %v347
      %534 = vmatprep.subr.mxu0 %v344
      %535 = vmatpush1.msra.mxu0 %v343
      %536 = vmatprep.subr.mxu0 %v340
      %537 = vmatpush1.msra.mxu0 %v339
      %538 = vmatprep.subr.mxu0 %v336
      %539 = vmatpush1.msra.mxu0 %v335
      %540 = vmatprep.subr.mxu0 %v332
      %541 = vmatpush1.msra.mxu0 %v331
      %542 = vmatprep.subr.mxu0 %v328
      %543 = vmatpush1.msra.mxu0 %v327
      %544 = vmatprep.subr.mxu0 %v324
      %545 = vmatpush1.msra.mxu0 %v323
      %546 = vmatprep.subr.mxu0 %v320
      %547 = vmatpush1.msra.mxu0 %v319
      %548 = vmatprep.subr.mxu0 %v444
      %549 = vmatpush2.msra.mxu0 %v443
      %550 = vmatprep.subr.mxu0 %v440
      %551 = vmatpush2.msra.mxu0 %v439
      %552 = vmatprep.subr.mxu0 %v436
      %553 = vmatpush2.msra.mxu0 %v435
      %554 = vmatprep.subr.mxu0 %v432
      %555 = vmatpush2.msra.mxu0 %v431
      %556 = vmatprep.subr.mxu0 %v428
      %557 = vmatpush2.msra.mxu0 %v427
      %558 = vmatprep.subr.mxu0 %v424
      %559 = vmatpush2.msra.mxu0 %v423
      %560 = vmatprep.subr.mxu0 %v420
      %561 = vmatpush2.msra.mxu0 %v419
      %562 = vmatprep.subr.mxu0 %v416
      %563 = vmatpush2.msra.mxu0 %v415
      %564 = vmatprep.subr.mxu0 %v412
      %565 = vmatpush2.msra.mxu0 %v411
      %566 = vmatprep.subr.mxu0 %v408
      %567 = vmatpush2.msra.mxu0 %v407
      %568 = vmatprep.subr.mxu0 %v404
      %569 = vmatpush2.msra.mxu0 %v403
      %570 = vmatprep.subr.mxu0 %v400
      %571 = vmatpush2.msra.mxu0 %v399
      %572 = vmatprep.subr.mxu0 %v396
      %573 = vmatpush2.msra.mxu0 %v395
      %574 = vmatprep.subr.mxu0 %v392
      %575 = vmatpush2.msra.mxu0 %v391
      %576 = vmatprep.subr.mxu0 %v388
      %577 = vmatpush2.msra.mxu0 %v387
      %578 = vmatprep.subr.mxu0 %v384
      %579 = vmatpush2.msra.mxu0 %v383
      %580 = vmatprep.mubr.f32.mxu0 %v316
      %581 = vmatmul.mubr.f32.gmra.mxu0 %v315
      %v582 = vpop.f32.mrf.mxu0
      %v583 = vadd.f32 0.0, %v582
      %v584 = vpop.f32.mrf.mxu0
      %v585 = vadd.f32 0.0, %v584
      %586 = vdwg.mxu0
      %vm587 = vcmask 523264
      %v589 = vsel %vm587, %v282, 0
      %591 = vmatprep.subr.mxu0 0.0
      %592 = vmatpush1.msra.mxu0 0.0
      %593 = vmatprep.subr.mxu0 0.0
      %594 = vmatpush1.msra.mxu0 0.0
      %595 = vmatprep.subr.mxu0 0.0
      %596 = vmatpush1.msra.mxu0 0.0
      %597 = vmatprep.subr.mxu0 0.0
      %598 = vmatpush1.msra.mxu0 0.0
      %599 = vmatprep.subr.mxu0 0.0
      %600 = vmatpush1.msra.mxu0 0.0
      %601 = vmatprep.subr.mxu0 0.0
      %602 = vmatpush1.msra.mxu0 0.0
      %603 = vmatprep.subr.mxu0 0.0
      %604 = vmatpush1.msra.mxu0 0.0
      %605 = vmatprep.subr.mxu0 0.0
      %606 = vmatpush1.msra.mxu0 0.0
      %607 = vmatprep.subr.mxu0 %v312
      %608 = vmatpush1.msra.mxu0 %v311
      %609 = vmatprep.subr.mxu0 %v308
      %610 = vmatpush1.msra.mxu0 %v307
      %611 = vmatprep.subr.mxu0 %v304
      %612 = vmatpush1.msra.mxu0 %v303
      %613 = vmatprep.subr.mxu0 %v300
      %614 = vmatpush1.msra.mxu0 %v299
      %615 = vmatprep.subr.mxu0 %v296
      %616 = vmatpush1.msra.mxu0 %v295
      %617 = vmatprep.subr.mxu0 %v292
      %618 = vmatpush1.msra.mxu0 %v291
      %619 = vmatprep.subr.mxu0 %v288
      %620 = vmatpush1.msra.mxu0 %v287
      %621 = vmatprep.subr.mxu0 %v284
      %622 = vmatpush1.msra.mxu0 %v283
      %623 = vmatprep.subr.mxu0 0.0
      %624 = vmatpush2.msra.mxu0 0.0
      %625 = vmatprep.subr.mxu0 0.0
      %626 = vmatpush2.msra.mxu0 0.0
      %627 = vmatprep.subr.mxu0 0.0
      %628 = vmatpush2.msra.mxu0 0.0
      %629 = vmatprep.subr.mxu0 0.0
      %630 = vmatpush2.msra.mxu0 0.0
      %631 = vmatprep.subr.mxu0 0.0
      %632 = vmatpush2.msra.mxu0 0.0
      %633 = vmatprep.subr.mxu0 0.0
      %634 = vmatpush2.msra.mxu0 0.0
      %635 = vmatprep.subr.mxu0 0.0
      %636 = vmatpush2.msra.mxu0 0.0
      %637 = vmatprep.subr.mxu0 0.0
      %638 = vmatpush2.msra.mxu0 0.0
      %639 = vmatprep.subr.mxu0 0.0
      %640 = vmatpush2.msra.mxu0 0.0
      %641 = vmatprep.subr.mxu0 0.0
      %642 = vmatpush2.msra.mxu0 0.0
      %643 = vmatprep.subr.mxu0 0.0
      %644 = vmatpush2.msra.mxu0 0.0
      %645 = vmatprep.subr.mxu0 0.0
      %646 = vmatpush2.msra.mxu0 0.0
      %647 = vmatprep.subr.mxu0 0.0
      %648 = vmatpush2.msra.mxu0 0.0
      %649 = vmatprep.subr.mxu0 0.0
      %650 = vmatpush2.msra.mxu0 0.0
      %651 = vmatprep.subr.mxu0 0.0
      %652 = vmatpush2.msra.mxu0 0.0
      %653 = vmatprep.subr.mxu0 0.0
      %654 = vmatpush2.msra.mxu0 0.0
      %655 = vmatprep.mubr.f32.mxu0 0.0
      %656 = vmatmul.mubr.f32.gmra.mxu0 %v589
      %v657 = vpop.f32.mrf.mxu0
      %v658 = vadd.f32 %v512, %v657
      %v659 = vpop.f32.mrf.mxu0
      %v660 = vadd.f32 %v514, %v659
      %661 = vdwg.mxu0
      %662 = vmatprep.subr.mxu0 0.0
      %663 = vmatpush1.msra.mxu0 0.0
      %664 = vmatprep.subr.mxu0 0.0
      %665 = vmatpush1.msra.mxu0 0.0
      %666 = vmatprep.subr.mxu0 0.0
      %667 = vmatpush1.msra.mxu0 0.0
      %668 = vmatprep.subr.mxu0 0.0
      %669 = vmatpush1.msra.mxu0 0.0
      %670 = vmatprep.subr.mxu0 0.0
      %671 = vmatpush1.msra.mxu0 0.0
      %672 = vmatprep.subr.mxu0 0.0
      %673 = vmatpush1.msra.mxu0 0.0
      %674 = vmatprep.subr.mxu0 0.0
      %675 = vmatpush1.msra.mxu0 0.0
      %676 = vmatprep.subr.mxu0 0.0
      %677 = vmatpush1.msra.mxu0 0.0
      %678 = vmatprep.subr.mxu0 %v314
      %679 = vmatpush1.msra.mxu0 %v313
      %680 = vmatprep.subr.mxu0 %v310
      %681 = vmatpush1.msra.mxu0 %v309
      %682 = vmatprep.subr.mxu0 %v306
      %683 = vmatpush1.msra.mxu0 %v305
      %684 = vmatprep.subr.mxu0 %v302
      %685 = vmatpush1.msra.mxu0 %v301
      %686 = vmatprep.subr.mxu0 %v298
      %687 = vmatpush1.msra.mxu0 %v297
      %688 = vmatprep.subr.mxu0 %v294
      %689 = vmatpush1.msra.mxu0 %v293
      %690 = vmatprep.subr.mxu0 %v290
      %691 = vmatpush1.msra.mxu0 %v289
      %692 = vmatprep.subr.mxu0 %v286
      %693 = vmatpush1.msra.mxu0 %v285
      %694 = vmatprep.subr.mxu0 0.0
      %695 = vmatpush2.msra.mxu0 0.0
      %696 = vmatprep.subr.mxu0 0.0
      %697 = vmatpush2.msra.mxu0 0.0
      %698 = vmatprep.subr.mxu0 0.0
      %699 = vmatpush2.msra.mxu0 0.0
      %700 = vmatprep.subr.mxu0 0.0
      %701 = vmatpush2.msra.mxu0 0.0
      %702 = vmatprep.subr.mxu0 0.0
      %703 = vmatpush2.msra.mxu0 0.0
      %704 = vmatprep.subr.mxu0 0.0
      %705 = vmatpush2.msra.mxu0 0.0
      %706 = vmatprep.subr.mxu0 0.0
      %707 = vmatpush2.msra.mxu0 0.0
      %708 = vmatprep.subr.mxu0 0.0
      %709 = vmatpush2.msra.mxu0 0.0
      %710 = vmatprep.subr.mxu0 0.0
      %711 = vmatpush2.msra.mxu0 0.0
      %712 = vmatprep.subr.mxu0 0.0
      %713 = vmatpush2.msra.mxu0 0.0
      %714 = vmatprep.subr.mxu0 0.0
      %715 = vmatpush2.msra.mxu0 0.0
      %716 = vmatprep.subr.mxu0 0.0
      %717 = vmatpush2.msra.mxu0 0.0
      %718 = vmatprep.subr.mxu0 0.0
      %719 = vmatpush2.msra.mxu0 0.0
      %720 = vmatprep.subr.mxu0 0.0
      %721 = vmatpush2.msra.mxu0 0.0
      %722 = vmatprep.subr.mxu0 0.0
      %723 = vmatpush2.msra.mxu0 0.0
      %724 = vmatprep.subr.mxu0 0.0
      %725 = vmatpush2.msra.mxu0 0.0
      %726 = vmatprep.mubr.f32.mxu0 0.0
      %727 = vmatmul.mubr.f32.gmra.mxu0 %v589
      %v728 = vpop.f32.mrf.mxu0
      %v729 = vadd.f32 %v583, %v728
      %v730 = vpop.f32.mrf.mxu0
      %v731 = vadd.f32 %v585, %v730
      %732 = vdwg.mxu0
      %v733 = vld [vmem:[%s4] sm:$0xf]
      %v735 = vlaneseq
      %v736 = vshrl.u32 %v735, 7
      %v737 = vsub.s32 0, %v736
      %v738 = vrot.slane %v733, %v737
      %v739 = vlaneseq
      %v740 = vshrl.u32 %v739, 7
      %v741 = vsub.s32 1, %v740
      %v742 = vrot.slane %v733, %v741
      %v743 = vlaneseq
      %v744 = vshrl.u32 %v743, 7
      %v745 = vsub.s32 2, %v744
      %v746 = vrot.slane %v733, %v745
      %v747 = vlaneseq
      %v748 = vshrl.u32 %v747, 7
      %v749 = vsub.s32 3, %v748
      %v750 = vrot.slane %v733, %v749
      %v755 = vadd.f32 %v658, %v738
      %v756 = vadd.f32 %v660, %v742
      %v757 = vadd.f32 %v729, %v746
      %v758 = vadd.f32 %v731, %v750
      %v759 = vmax.f32 %v755, 0.0
      %v760 = vmax.f32 %v756, 0.0
      %v761 = vmax.f32 %v757, 0.0
      %v762 = vmax.f32 %v758, 0.0
      %763 = vst [vmem:[%s276] sm:$0xff] %v759
      %764 = vst [vmem:[%s276 + $0x8] sm:$0xff] %v760
      %765 = vst [vmem:[%s276 + $0x10] sm:$0xff] %v761
      %766 = vst [vmem:[%s276 + $0x18] sm:$0xff] %v762
      %v767 = vrot.slane %v759, 4
      %v768 = vadd.f32 %v759, %v767
      %v769 = vrot.slane %v768, 2
      %v770 = vadd.f32 %v768, %v769
      %v771 = vrot.slane %v770, 1
      %v772 = vadd.f32 %v770, %v771
      %v773 = vrot.slane %v760, 4
      %v774 = vadd.f32 %v760, %v773
      %v775 = vrot.slane %v774, 2
      %v776 = vadd.f32 %v774, %v775
      %v777 = vrot.slane %v776, 1
      %v778 = vadd.f32 %v776, %v777
      %v779 = vrot.slane %v761, 4
      %v780 = vadd.f32 %v761, %v779
      %v781 = vrot.slane %v780, 2
      %v782 = vadd.f32 %v780, %v781
      %v783 = vrot.slane %v782, 1
      %v784 = vadd.f32 %v782, %v783
      %v785 = vrot.slane %v762, 4
      %v786 = vadd.f32 %v762, %v785
      %v787 = vrot.slane %v786, 2
      %v788 = vadd.f32 %v786, %v787
      %v789 = vrot.slane %v788, 1
      %v790 = vadd.f32 %v788, %v789
      %v791 = vmul.f32 %v759, %v759
      %v792 = vmul.f32 %v760, %v760
      %v793 = vmul.f32 %v761, %v761
      %v794 = vmul.f32 %v762, %v762
      %v795 = vrot.slane %v791, 4
      %v796 = vadd.f32 %v791, %v795
      %v797 = vrot.slane %v796, 2
      %v798 = vadd.f32 %v796, %v797
      %v799 = vrot.slane %v798, 1
      %v800 = vadd.f32 %v798, %v799
      %v801 = vrot.slane %v792, 4
      %v802 = vadd.f32 %v792, %v801
      %v803 = vrot.slane %v802, 2
      %v804 = vadd.f32 %v802, %v803
      %v805 = vrot.slane %v804, 1
      %v806 = vadd.f32 %v804, %v805
      %v807 = vrot.slane %v793, 4
      %v808 = vadd.f32 %v793, %v807
      %v809 = vrot.slane %v808, 2
      %v810 = vadd.f32 %v808, %v809
      %v811 = vrot.slane %v810, 1
      %v812 = vadd.f32 %v810, %v811
      %v813 = vrot.slane %v794, 4
      %v814 = vadd.f32 %v794, %v813
      %v815 = vrot.slane %v814, 2
      %v816 = vadd.f32 %v814, %v815
      %v817 = vrot.slane %v816, 1
      %v818 = vadd.f32 %v816, %v817
      %vm819 = vcmask 1040384
      %v820 = vsel %vm819, %v772, %v800
      %v821 = vsel %vm819, %v778, %v806
      %v822 = vsel %vm819, %v784, %v812
      %v823 = vsel %vm819, %v790, %v818
      %vm824 = vcmask 1041408
      %v825 = vsel %vm824, %v820, 0.0
      %v826 = vsel %vm824, %v821, 0.0
      %v827 = vsel %vm824, %v822, 0.0
      %v828 = vsel %vm824, %v823, 0.0
      %829 = vst [vmem:[%s281] sm:$0xff] %v825
      %830 = vst [vmem:[%s281 + $0x8] sm:$0xff] %v826
      %831 = vst [vmem:[%s281 + $0x10] sm:$0xff] %v827
      %832 = vst [vmem:[%s281 + $0x18] sm:$0xff] %v828
      %p833 = scmp.lt.s32.totalorder %s18, 1
      %s834 = scalar_select %p833, %s18, 1
      %s835 = smul.addr %s834, 4
      %s836 = smul.addr %s835, 8
      %s837 = scalar_lea.vmem %s5, %s836
      %p838 = scmp.lt.s32.totalorder %s18, 1
      %s839 = scalar_select %p838, %s18, 1
      %s840 = smul.addr %s839, 4
      %s841 = smul.addr %s840, 8
      %s842 = scalar_lea.vmem %s6, %s841
      // Predicated region
      $region41: #{unet_block_forward.2} parent=39 // pred_check
        %p843 = pneg %p151
      $region42: #{unet_block_forward.2} parent=39 // pred_check_branch
        %845 = sbr.rel (%p843) target = $region44
      $region43: #{unet_block_forward.2} parent=39 // pred_region
        _
      $region44: #{unet_block_forward.2} parent=39 // pred_fallthru
        _
      // Predicated region
      $region45: #{unet_block_forward.2} parent=39 // pred_check
        %p846 = pneg %p177
      $region46: #{unet_block_forward.2} parent=39 // pred_check_branch
        %848 = sbr.rel (%p846) target = $region48
      $region47: #{unet_block_forward.2} parent=39 // pred_region
        _
      $region48: #{unet_block_forward.2} parent=39 // pred_fallthru
        _
    $region40: #{unet_block_forward.2} parent=5 // pred_fallthru
      _
    %p849 = scmp.le.s32.totalorder 2, %s13
    // Predicated region
    $region49: #{unet_block_forward.2} parent=5 // pred_check
      %p850 = pneg %p849
    $region50: #{unet_block_forward.2} parent=5 // pred_check_branch
      %852 = sbr.rel (%p850) target = $region52
    $region51: #{unet_block_forward.2} parent=5 // pred_region
      %s853 = ssub.s32 %s13, 2
      // Predicated region
      $region53: #{unet_block_forward.2} parent=51 // pred_check
        %p854 = pneg %p157
      $region54: #{unet_block_forward.2} parent=51 // pred_check_branch
        %856 = sbr.rel (%p854) target = $region56
      $region55: #{unet_block_forward.2} parent=51 // pred_region
        %p857 = scmp.lt.s32.totalorder %s19, 1
        %s858 = scalar_select %p857, %s19, 1
        %s859 = smul.addr %s858, 4
        %s860 = smul.addr %s859, 8
        %s861 = scalar_lea.vmem %s5, %s860
      $region56: #{unet_block_forward.2} parent=51 // pred_fallthru
        _
      // Predicated region
      $region57: #{unet_block_forward.2} parent=51 // pred_check
        %p862 = pneg %p183
      $region58: #{unet_block_forward.2} parent=51 // pred_check_branch
        %864 = sbr.rel (%p862) target = $region60
      $region59: #{unet_block_forward.2} parent=51 // pred_region
        %p865 = scmp.lt.s32.totalorder %s19, 1
        %s866 = scalar_select %p865, %s19, 1
        %s867 = smul.addr %s866, 4
        %s868 = smul.addr %s867, 8
        %s869 = scalar_lea.vmem %s6, %s868
      $region60: #{unet_block_forward.2} parent=51 // pred_fallthru
        _
    $region52: #{unet_block_forward.2} parent=5 // pred_fallthru
      _
  $region6: #{unet_block_forward.2} parent=0 // loop_footer
    %s17 = sadd.s32 1, %s13
  $region7: #{unet_block_forward.2} parent=0 // loop_footer_branch
    %12 = sbr.rel target = $region3
  $region8: #{unet_block_forward.2} parent=0 // loop_exit
    _

</llo_original>
